<compile_context>
chip_gen: v6e
topology: v6e:2x2x1
jax: 0.10.0
libtpu: 0.0.40
codegen_flags: <defaults>
</compile_context>

<pallas_src>
import jax
import jax.numpy as jnp
from jax import lax
from jax.experimental import pallas as pl
from jax.experimental.pallas import tpu as pltpu


# -----------------------------------------------------------------------------
# Small helpers
# -----------------------------------------------------------------------------
def _round_up(x, m):
    return ((x + m - 1) // m) * m


def _largest_divisor_at_most(n, limit):
    limit = max(1, min(n, limit))
    for d in range(limit, 0, -1):
        if n % d == 0:
            return d
    return 1


# -----------------------------------------------------------------------------
# Pallas kernel factory
# -----------------------------------------------------------------------------
def _make_slayer_kernel(D, Bt, Mt, SUB, K, Kp):
    n_sub = Mt // SUB

    def kernel(x_ref, m_ref, w1_ref, b1_ref, w2_ref, b2_ref, w3_ref, b3_ref,
               o_ref):
        # x_ref : (Bt, D, Mt)   viewed-batch tile (channels in sublanes)
        # m_ref : (Bt, Mt)      not-dummy mask tile (also encodes B/M padding)
        # w1 (H,D) b1 (H,1)  w2 (H,H) b2 (H,1)  w3 (Kp,H) b3 (Kp,1)  -- VMEM
        # o_ref : (1, 1, Bt, K) per-(batch-chunk, point-chunk) partial sums
        w1 = w1_ref[...]
        b1 = b1_ref[...]
        w2 = w2_ref[...]
        b2 = b2_ref[...]
        w3 = w3_ref[...]
        b3 = b3_ref[...]

        for b in range(Bt):                      # static, small (<= 32)
            def body(j, acc):
                off = pl.multiple_of(j * SUB, SUB)
                msk = m_ref[pl.ds(b, 1), pl.ds(off, SUB)]            # (1, SUB)

                # conv_1 (1x1, D->H) + ReLU: tiny D-deep contraction as
                # broadcasted VPU FMAs producing a sublane-full (H, SUB) slab.
                z1 = b1
                for d in range(D):
                    xd = x_ref[b, pl.ds(d, 1), pl.ds(off, SUB)]      # (1, SUB)
                    z1 = z1 + w1[:, d:d + 1] * xd                    # (H, SUB)
                h1 = jnp.maximum(z1, 0.0)

                # conv_2 / conv_3: 8-deep contractions on the MXU.
                h2 = jnp.maximum(
                    jnp.dot(w2, h1, preferred_element_type=jnp.float32) + b2,
                    0.0)                                             # (H, SUB)
                z3 = jnp.dot(w3, h2, preferred_element_type=jnp.float32) + b3

                # Sigmoid (EUP), mask dummy / padded points, reduce over lanes.
                y = jax.nn.sigmoid(z3) * msk                         # (Kp, SUB)
                return acc + jnp.sum(y, axis=1, keepdims=True)       # (Kp, 1)

            acc = lax.fori_loop(0, n_sub, body,
                                jnp.zeros((Kp, 1), jnp.float32))
            o_ref[0, 0, b, :] = acc[:K, 0]

    return kernel


# -----------------------------------------------------------------------------
# Wrapper
# -----------------------------------------------------------------------------
def slayer_conv_forward(prepared_batch, not_dummy, params):
    """prepared_batch: (B, M, D) float32, not_dummy: (B, M) float32."""
    w1, b1, w2, b2, w3, b3 = params
    B, M, D = prepared_batch.shape
    H = w1.shape[0]
    K = w3.shape[0]

    # Reproduce `batch.view(batch_size, point_dimension, -1)` exactly:
    # a flat reshape of (B, M, D) into (B, D, M) (NOT a transpose).
    x_viewed = jnp.reshape(prepared_batch.astype(jnp.float32), (B, D, M))
    mask = not_dummy.astype(jnp.float32)

    # --- point-axis tiling (lane dim) --------------------------------------
    LANE, SUB_MAX, MT_CAP = 128, 512, 4096
    M_aligned = _round_up(max(M, 1), LANE)
    SUB = min(SUB_MAX, M_aligned)                 # inner sub-chunk (lanes)
    M_pad = _round_up(M_aligned, SUB)
    n_sub_total = M_pad // SUB
    Mt = SUB * _largest_divisor_at_most(n_sub_total, max(1, MT_CAP // SUB))
    nm = M_pad // Mt

    # --- batch-axis tiling (sublane-friendly, multiple of 8) ---------------
    bt8 = min(max(1, 2048 // Mt), 4, (B + 7) // 8)
    Bt = 8 * bt8
    B_pad = _round_up(B, Bt)
    nb = B_pad // Bt

    # Zero-pad batch and point axes; padding is folded into the mask, so the
    # masked reduction stays exact (no partial/garbage tiles are ever read).
    x_p = jnp.pad(x_viewed, ((0, B_pad - B), (0, 0), (0, M_pad - M)))
    m_p = jnp.pad(mask, ((0, B_pad - B), (0, M_pad - M)))

    # --- parameters (small VMEM blocks; pad output channels to mult. of 8) --
    Kp = _round_up(K, 8)
    w1f = w1.astype(jnp.float32).reshape(H, D)
    b1f = b1.astype(jnp.float32).reshape(H, 1)
    w2f = w2.astype(jnp.float32).reshape(H, H)
    b2f = b2.astype(jnp.float32).reshape(H, 1)
    w3f = jnp.zeros((Kp, H), jnp.float32).at[:K].set(
        w3.astype(jnp.float32).reshape(K, H))
    b3f = jnp.zeros((Kp, 1), jnp.float32).at[:K].set(
        b3.astype(jnp.float32).reshape(K, 1))

    def const_spec(shape):
        return pl.BlockSpec(shape, lambda bi, mi: (0,) * len(shape))

    out = pl.pallas_call(
        _make_slayer_kernel(D, Bt, Mt, SUB, K, Kp),
        out_shape=jax.ShapeDtypeStruct((nb, nm, Bt, K), jnp.float32),
        grid=(nb, nm),
        in_specs=[
            pl.BlockSpec((Bt, D, Mt), lambda bi, mi: (bi, 0, mi)),
            pl.BlockSpec((Bt, Mt), lambda bi, mi: (bi, mi)),
            const_spec((H, D)), const_spec((H, 1)),
            const_spec((H, H)), const_spec((H, 1)),
            const_spec((Kp, H)), const_spec((Kp, 1)),
        ],
        out_specs=pl.BlockSpec((1, 1, Bt, K), lambda bi, mi: (bi, mi, 0, 0)),
        compiler_params=pltpu.CompilerParams(
            dimension_semantics=("parallel", "parallel")),
    )(x_p, m_p, w1f, b1f, w2f, b2f, w3f, b3f)

    # Reduce the per-point-chunk partials, drop batch padding, mimic .squeeze()
    y = jnp.sum(out, axis=1).reshape(B_pad, K)[:B]
    return jnp.squeeze(y)


# -----------------------------------------------------------------------------
# Plain-JAX reference (mirrors the PyTorch forward literally) for verification
# -----------------------------------------------------------------------------
def slayer_conv_reference(prepared_batch, not_dummy, params, n_elements):
    w1, b1, w2, b2, w3, b3 = params
    B, M, D = prepared_batch.shape
    x = jnp.reshape(prepared_batch, (B, D, M))
    h = jnp.maximum(jnp.einsum('od,bdm->bom', w1, x) + b1[None, :, :], 0.0)
    h = jnp.maximum(jnp.einsum('oi,bim->bom', w2, h) + b2[None, :, :], 0.0)
    y = jax.nn.sigmoid(jnp.einsum('oi,bim->bom', w3, h) + b3[None, :, :])
    y = y.reshape(B, -1)
    nd = jnp.concatenate([not_dummy] * n_elements, axis=1)
    y = (y * nd).reshape(B, n_elements, -1).sum(axis=2)
    return jnp.squeeze(y)


# -----------------------------------------------------------------------------
# prepare_batch equivalent: pad multisets to max_points, build dummy mask
# -----------------------------------------------------------------------------
def prepare_batch_jax(multisets, point_dim):
    batch_size = len(multisets)
    max_points = max(1, max(ms.shape[0] for ms in multisets))
    batch = jnp.zeros((batch_size, max_points, point_dim), jnp.float32)
    not_dummy = jnp.zeros((batch_size, max_points), jnp.float32)
    for i, ms in enumerate(multisets):
        n = ms.shape[0]
        if n > 0:
            batch = batch.at[i, :n, :].set(ms.astype(jnp.float32))
            not_dummy = not_dummy.at[i, :n].set(1.0)
    return batch, not_dummy, max_points, batch_size


if __name__ == "__main__":
    key = jax.random.PRNGKey(0)
    n_elements = 4        # K
    point_dim = 2         # D
    keys = jax.random.split(key, 10)

    # four multisets of different cardinality (padded to max_points = 16)
    ms0 = jax.random.uniform(keys[0], (16, point_dim), jnp.float32)
    ms1 = jax.random.uniform(keys[1], (10, point_dim), jnp.float32)
    ms2 = jax.random.uniform(keys[2], (7, point_dim), jnp.float32)
    ms3 = jax.random.uniform(keys[3], (16, point_dim), jnp.float32)
    prepared, not_dummy, max_points, batch_size = prepare_batch_jax(
        [ms0, ms1, ms2, ms3], point_dim)

    # Conv1d kernel_size=1 -> plain (out, in) matrices; biases as column vectors.
    w1 = 0.5 * jax.random.normal(keys[4], (8, point_dim), jnp.float32)
    b1 = 0.1 * jax.random.normal(keys[5], (8, 1), jnp.float32)
    w2 = 0.5 * jax.random.normal(keys[6], (8, 8), jnp.float32)
    b2 = 0.1 * jax.random.normal(keys[7], (8, 1), jnp.float32)
    w3 = 0.5 * jax.random.normal(keys[8], (n_elements, 8), jnp.float32)
    b3 = 0.1 * jax.random.normal(keys[9], (n_elements, 1), jnp.float32)
    params = (w1, b1, w2, b2, w3, b3)

    out = jax.block_until_ready(slayer_conv_forward(prepared, not_dummy, params))
    ref = jax.block_until_ready(
        slayer_conv_reference(prepared, not_dummy, params, n_elements))

    assert out.shape == (batch_size, n_elements), out.shape
    assert jnp.allclose(out, ref, atol=1e-5, rtol=1e-5), (out, ref)
    print("KERNEL_OK")
</pallas_src>

<mosaic_0001>
module attributes {stable_mosaic.version = 11 : i64} {
  func.func @kernel(%arg0: i32, %arg1: i32, %arg2: memref<8x2x128xf32, #tpu.memory_space<vmem>>, %arg3: memref<8x128xf32, #tpu.memory_space<vmem>>, %arg4: memref<8x2xf32, #tpu.memory_space<vmem>>, %arg5: memref<8x1xf32, #tpu.memory_space<vmem>>, %arg6: memref<8x8xf32, #tpu.memory_space<vmem>>, %arg7: memref<8x1xf32, #tpu.memory_space<vmem>>, %arg8: memref<8x8xf32, #tpu.memory_space<vmem>>, %arg9: memref<8x1xf32, #tpu.memory_space<vmem>>, %arg10: memref<1x1x8x4xf32, #tpu.memory_space<vmem>>) attributes {dimension_semantics = [#tpu.dimension_semantics<parallel>, #tpu.dimension_semantics<parallel>], iteration_bounds = array<i64: 1, 1>, scalar_prefetch = 0 : i64, scratch_operands = 0 : i64, tpu.core_type = #tpu.core_type<tc>, window_params = [{transform_indices = @transform_0, window_bounds = array<i64: 8, 2, 128>}, {transform_indices = @transform_1, window_bounds = array<i64: 8, 128>}, {pipeline_mode = #tpu.pipeline_mode<synchronous>, transform_indices = @transform_2, window_bounds = array<i64: 8, 2>}, {pipeline_mode = #tpu.pipeline_mode<synchronous>, transform_indices = @transform_3, window_bounds = array<i64: 8, 1>}, {pipeline_mode = #tpu.pipeline_mode<synchronous>, transform_indices = @transform_4, window_bounds = array<i64: 8, 8>}, {pipeline_mode = #tpu.pipeline_mode<synchronous>, transform_indices = @transform_5, window_bounds = array<i64: 8, 1>}, {pipeline_mode = #tpu.pipeline_mode<synchronous>, transform_indices = @transform_6, window_bounds = array<i64: 8, 8>}, {pipeline_mode = #tpu.pipeline_mode<synchronous>, transform_indices = @transform_7, window_bounds = array<i64: 8, 1>}, {transform_indices = @transform_8, window_bounds = array<i64: 1, 1, 8, 4>}]} {
    %c0 = arith.constant 0 : index
    %c0_0 = arith.constant 0 : index
    %0 = vector.load %arg4[%c0, %c0_0] : memref<8x2xf32, #tpu.memory_space<vmem>>, vector<8x2xf32>
    %c0_1 = arith.constant 0 : index
    %c0_2 = arith.constant 0 : index
    %1 = vector.load %arg5[%c0_1, %c0_2] : memref<8x1xf32, #tpu.memory_space<vmem>>, vector<8x1xf32>
    %c0_3 = arith.constant 0 : index
    %c0_4 = arith.constant 0 : index
    %2 = vector.load %arg6[%c0_3, %c0_4] : memref<8x8xf32, #tpu.memory_space<vmem>>, vector<8x8xf32>
    %c0_5 = arith.constant 0 : index
    %c0_6 = arith.constant 0 : index
    %3 = vector.load %arg7[%c0_5, %c0_6] : memref<8x1xf32, #tpu.memory_space<vmem>>, vector<8x1xf32>
    %c0_7 = arith.constant 0 : index
    %c0_8 = arith.constant 0 : index
    %4 = vector.load %arg8[%c0_7, %c0_8] : memref<8x8xf32, #tpu.memory_space<vmem>>, vector<8x8xf32>
    %c0_9 = arith.constant 0 : index
    %c0_10 = arith.constant 0 : index
    %5 = vector.load %arg9[%c0_9, %c0_10] : memref<8x1xf32, #tpu.memory_space<vmem>>, vector<8x1xf32>
    %cst = arith.constant 0.000000e+00 : f32
    %6 = vector.broadcast %cst : f32 to vector<8x1xf32>
    %c0_i32 = arith.constant 0 : i32
    %c128_i32 = arith.constant 128 : i32
    %7 = arith.muli %c0_i32, %c128_i32 : i32
    %8 = tpu.assume_multiple %7, 128 : i32
    %c0_11 = arith.constant 0 : index
    %9 = arith.index_cast %8 : i32 to index
    %10 = vector.load %arg3[%c0_11, %9] : memref<8x128xf32, #tpu.memory_space<vmem>>, vector<1x128xf32>
    %c0_12 = arith.constant 0 : index
    %c0_13 = arith.constant 0 : index
    %11 = arith.index_cast %8 : i32 to index
    %12 = vector.load %arg2[%c0_12, %c0_13, %11] : memref<8x2x128xf32, #tpu.memory_space<vmem>>, vector<1x1x128xf32>
    %13 = vector.shape_cast %12 : vector<1x1x128xf32> to vector<1x128xf32>
    %14 = vector.extract_strided_slice %0 {offsets = [0, 0], sizes = [8, 1], strides = [1, 1]} : vector<8x2xf32> to vector<8x1xf32>
    %15 = vector.broadcast %14 : vector<8x1xf32> to vector<8x128xf32>
    %16 = vector.broadcast %13 : vector<1x128xf32> to vector<8x128xf32>
    %17 = arith.mulf %15, %16 : vector<8x128xf32>
    %18 = vector.broadcast %1 : vector<8x1xf32> to vector<8x128xf32>
    %19 = arith.addf %18, %17 : vector<8x128xf32>
    %c0_14 = arith.constant 0 : index
    %c1 = arith.constant 1 : index
    %20 = arith.index_cast %8 : i32 to index
    %21 = vector.load %arg2[%c0_14, %c1, %20] : memref<8x2x128xf32, #tpu.memory_space<vmem>>, vector<1x1x128xf32>
    %22 = vector.shape_cast %21 : vector<1x1x128xf32> to vector<1x128xf32>
    %23 = vector.extract_strided_slice %0 {offsets = [0, 1], sizes = [8, 1], strides = [1, 1]} : vector<8x2xf32> to vector<8x1xf32>
    %24 = vector.broadcast %23 : vector<8x1xf32> to vector<8x128xf32>
    %25 = vector.broadcast %22 : vector<1x128xf32> to vector<8x128xf32>
    %26 = arith.mulf %24, %25 : vector<8x128xf32>
    %27 = arith.addf %19, %26 : vector<8x128xf32>
    %cst_15 = arith.constant 0.000000e+00 : f32
    %28 = vector.broadcast %cst_15 : f32 to vector<8x128xf32>
    %29 = arith.maximumf %27, %28 : vector<8x128xf32>
    %cst_16 = arith.constant dense<0.000000e+00> : vector<8x128xf32>
    %30 = tpu.matmul %2, %29, %cst_16 {dimension_numbers = #tpu.dot_dimension_numbers<[1], [0], [0], [1], [0, 0, 1, 1], [], []>} : vector<8x8xf32>, vector<8x128xf32>, vector<8x128xf32> -> vector<8x128xf32>
    %31 = vector.broadcast %3 : vector<8x1xf32> to vector<8x128xf32>
    %32 = arith.addf %30, %31 : vector<8x128xf32>
    %cst_17 = arith.constant 0.000000e+00 : f32
    %33 = vector.broadcast %cst_17 : f32 to vector<8x128xf32>
    %34 = arith.maximumf %32, %33 : vector<8x128xf32>
    %cst_18 = arith.constant dense<0.000000e+00> : vector<8x128xf32>
    %35 = tpu.matmul %4, %34, %cst_18 {dimension_numbers = #tpu.dot_dimension_numbers<[1], [0], [0], [1], [0, 0, 1, 1], [], []>} : vector<8x8xf32>, vector<8x128xf32>, vector<8x128xf32> -> vector<8x128xf32>
    %36 = vector.broadcast %5 : vector<8x1xf32> to vector<8x128xf32>
    %37 = arith.addf %35, %36 : vector<8x128xf32>
    %38 = arith.negf %37 : vector<8x128xf32>
    %39 = math.exp %38 : vector<8x128xf32>
    %cst_19 = arith.constant 1.000000e+00 : f32
    %40 = vector.broadcast %cst_19 : f32 to vector<8x128xf32>
    %41 = arith.addf %40, %39 : vector<8x128xf32>
    %42 = arith.divf %40, %41 : vector<8x128xf32>
    %43 = vector.broadcast %10 : vector<1x128xf32> to vector<8x128xf32>
    %44 = arith.mulf %42, %43 : vector<8x128xf32>
    %cst_20 = arith.constant dense<0.000000e+00> : vector<8xf32>
    %45 = vector.multi_reduction <add>, %44, %cst_20 [1] : vector<8x128xf32> to vector<8xf32>
    %46 = vector.shape_cast %45 : vector<8xf32> to vector<8x1xf32>
    %47 = arith.addf %6, %46 : vector<8x1xf32>
    %c1_i32 = arith.constant 1 : i32
    %48 = vector.extract_strided_slice %47 {offsets = [0, 0], sizes = [4, 1], strides = [1, 1]} : vector<8x1xf32> to vector<4x1xf32>
    %49 = vector.shape_cast %48 : vector<4x1xf32> to vector<4xf32>
    %c0_21 = arith.constant 0 : index
    %c0_22 = arith.constant 0 : index
    %c0_23 = arith.constant 0 : index
    %c0_24 = arith.constant 0 : index
    %50 = vector.load %arg10[%c0_21, %c0_22, %c0_23, %c0_24] : memref<1x1x8x4xf32, #tpu.memory_space<vmem>>, vector<1x1x1x4xf32>
    %51 = vector.shape_cast %50 : vector<1x1x1x4xf32> to vector<4xf32>
    %52 = vector.shape_cast %49 : vector<4xf32> to vector<1x1x1x4xf32>
    tpu.vector_store %arg10[%c0_21, %c0_22, %c0_23, %c0_24], %52 {strides = array<i32>} : memref<1x1x8x4xf32, #tpu.memory_space<vmem>>, vector<1x1x1x4xf32>,
    %cst_25 = arith.constant 0.000000e+00 : f32
    %53 = vector.broadcast %cst_25 : f32 to vector<8x1xf32>
    %c0_i32_26 = arith.constant 0 : i32
    %c128_i32_27 = arith.constant 128 : i32
    %54 = arith.muli %c0_i32_26, %c128_i32_27 : i32
    %55 = tpu.assume_multiple %54, 128 : i32
    %c1_28 = arith.constant 1 : index
    %56 = arith.index_cast %55 : i32 to index
    %57 = vector.load %arg3[%c1_28, %56] : memref<8x128xf32, #tpu.memory_space<vmem>>, vector<1x128xf32>
    %c1_29 = arith.constant 1 : index
    %c0_30 = arith.constant 0 : index
    %58 = arith.index_cast %55 : i32 to index
    %59 = vector.load %arg2[%c1_29, %c0_30, %58] : memref<8x2x128xf32, #tpu.memory_space<vmem>>, vector<1x1x128xf32>
    %60 = vector.shape_cast %59 : vector<1x1x128xf32> to vector<1x128xf32>
    %61 = vector.extract_strided_slice %0 {offsets = [0, 0], sizes = [8, 1], strides = [1, 1]} : vector<8x2xf32> to vector<8x1xf32>
    %62 = vector.broadcast %61 : vector<8x1xf32> to vector<8x128xf32>
    %63 = vector.broadcast %60 : vector<1x128xf32> to vector<8x128xf32>
    %64 = arith.mulf %62, %63 : vector<8x128xf32>
    %65 = vector.broadcast %1 : vector<8x1xf32> to vector<8x128xf32>
    %66 = arith.addf %65, %64 : vector<8x128xf32>
    %c1_31 = arith.constant 1 : index
    %c1_32 = arith.constant 1 : index
    %67 = arith.index_cast %55 : i32 to index
    %68 = vector.load %arg2[%c1_31, %c1_32, %67] : memref<8x2x128xf32, #tpu.memory_space<vmem>>, vector<1x1x128xf32>
    %69 = vector.shape_cast %68 : vector<1x1x128xf32> to vector<1x128xf32>
    %70 = vector.extract_strided_slice %0 {offsets = [0, 1], sizes = [8, 1], strides = [1, 1]} : vector<8x2xf32> to vector<8x1xf32>
    %71 = vector.broadcast %70 : vector<8x1xf32> to vector<8x128xf32>
    %72 = vector.broadcast %69 : vector<1x128xf32> to vector<8x128xf32>
    %73 = arith.mulf %71, %72 : vector<8x128xf32>
    %74 = arith.addf %66, %73 : vector<8x128xf32>
    %cst_33 = arith.constant 0.000000e+00 : f32
    %75 = vector.broadcast %cst_33 : f32 to vector<8x128xf32>
    %76 = arith.maximumf %74, %75 : vector<8x128xf32>
    %cst_34 = arith.constant dense<0.000000e+00> : vector<8x128xf32>
    %77 = tpu.matmul %2, %76, %cst_34 {dimension_numbers = #tpu.dot_dimension_numbers<[1], [0], [0], [1], [0, 0, 1, 1], [], []>} : vector<8x8xf32>, vector<8x128xf32>, vector<8x128xf32> -> vector<8x128xf32>
    %78 = vector.broadcast %3 : vector<8x1xf32> to vector<8x128xf32>
    %79 = arith.addf %77, %78 : vector<8x128xf32>
    %cst_35 = arith.constant 0.000000e+00 : f32
    %80 = vector.broadcast %cst_35 : f32 to vector<8x128xf32>
    %81 = arith.maximumf %79, %80 : vector<8x128xf32>
    %cst_36 = arith.constant dense<0.000000e+00> : vector<8x128xf32>
    %82 = tpu.matmul %4, %81, %cst_36 {dimension_numbers = #tpu.dot_dimension_numbers<[1], [0], [0], [1], [0, 0, 1, 1], [], []>} : vector<8x8xf32>, vector<8x128xf32>, vector<8x128xf32> -> vector<8x128xf32>
    %83 = vector.broadcast %5 : vector<8x1xf32> to vector<8x128xf32>
    %84 = arith.addf %82, %83 : vector<8x128xf32>
    %85 = arith.negf %84 : vector<8x128xf32>
    %86 = math.exp %85 : vector<8x128xf32>
    %cst_37 = arith.constant 1.000000e+00 : f32
    %87 = vector.broadcast %cst_37 : f32 to vector<8x128xf32>
    %88 = arith.addf %87, %86 : vector<8x128xf32>
    %89 = arith.divf %87, %88 : vector<8x128xf32>
    %90 = vector.broadcast %57 : vector<1x128xf32> to vector<8x128xf32>
    %91 = arith.mulf %89, %90 : vector<8x128xf32>
    %cst_38 = arith.constant dense<0.000000e+00> : vector<8xf32>
    %92 = vector.multi_reduction <add>, %91, %cst_38 [1] : vector<8x128xf32> to vector<8xf32>
    %93 = vector.shape_cast %92 : vector<8xf32> to vector<8x1xf32>
    %94 = arith.addf %53, %93 : vector<8x1xf32>
    %c1_i32_39 = arith.constant 1 : i32
    %95 = vector.extract_strided_slice %94 {offsets = [0, 0], sizes = [4, 1], strides = [1, 1]} : vector<8x1xf32> to vector<4x1xf32>
    %96 = vector.shape_cast %95 : vector<4x1xf32> to vector<4xf32>
    %c0_40 = arith.constant 0 : index
    %c0_41 = arith.constant 0 : index
    %c1_42 = arith.constant 1 : index
    %c0_43 = arith.constant 0 : index
    %97 = vector.load %arg10[%c0_40, %c0_41, %c1_42, %c0_43] : memref<1x1x8x4xf32, #tpu.memory_space<vmem>>, vector<1x1x1x4xf32>
    %98 = vector.shape_cast %97 : vector<1x1x1x4xf32> to vector<4xf32>
    %99 = vector.shape_cast %96 : vector<4xf32> to vector<1x1x1x4xf32>
    tpu.vector_store %arg10[%c0_40, %c0_41, %c1_42, %c0_43], %99 {strides = array<i32>} : memref<1x1x8x4xf32, #tpu.memory_space<vmem>>, vector<1x1x1x4xf32>,
    %cst_44 = arith.constant 0.000000e+00 : f32
    %100 = vector.broadcast %cst_44 : f32 to vector<8x1xf32>
    %c0_i32_45 = arith.constant 0 : i32
    %c128_i32_46 = arith.constant 128 : i32
    %101 = arith.muli %c0_i32_45, %c128_i32_46 : i32
    %102 = tpu.assume_multiple %101, 128 : i32
    %c2 = arith.constant 2 : index
    %103 = arith.index_cast %102 : i32 to index
    %104 = vector.load %arg3[%c2, %103] : memref<8x128xf32, #tpu.memory_space<vmem>>, vector<1x128xf32>
    %c2_47 = arith.constant 2 : index
    %c0_48 = arith.constant 0 : index
    %105 = arith.index_cast %102 : i32 to index
    %106 = vector.load %arg2[%c2_47, %c0_48, %105] : memref<8x2x128xf32, #tpu.memory_space<vmem>>, vector<1x1x128xf32>
    %107 = vector.shape_cast %106 : vector<1x1x128xf32> to vector<1x128xf32>
    %108 = vector.extract_strided_slice %0 {offsets = [0, 0], sizes = [8, 1], strides = [1, 1]} : vector<8x2xf32> to vector<8x1xf32>
    %109 = vector.broadcast %108 : vector<8x1xf32> to vector<8x128xf32>
    %110 = vector.broadcast %107 : vector<1x128xf32> to vector<8x128xf32>
    %111 = arith.mulf %109, %110 : vector<8x128xf32>
    %112 = vector.broadcast %1 : vector<8x1xf32> to vector<8x128xf32>
    %113 = arith.addf %112, %111 : vector<8x128xf32>
    %c2_49 = arith.constant 2 : index
    %c1_50 = arith.constant 1 : index
    %114 = arith.index_cast %102 : i32 to index
    %115 = vector.load %arg2[%c2_49, %c1_50, %114] : memref<8x2x128xf32, #tpu.memory_space<vmem>>, vector<1x1x128xf32>
    %116 = vector.shape_cast %115 : vector<1x1x128xf32> to vector<1x128xf32>
    %117 = vector.extract_strided_slice %0 {offsets = [0, 1], sizes = [8, 1], strides = [1, 1]} : vector<8x2xf32> to vector<8x1xf32>
    %118 = vector.broadcast %117 : vector<8x1xf32> to vector<8x128xf32>
    %119 = vector.broadcast %116 : vector<1x128xf32> to vector<8x128xf32>
    %120 = arith.mulf %118, %119 : vector<8x128xf32>
    %121 = arith.addf %113, %120 : vector<8x128xf32>
    %cst_51 = arith.constant 0.000000e+00 : f32
    %122 = vector.broadcast %cst_51 : f32 to vector<8x128xf32>
    %123 = arith.maximumf %121, %122 : vector<8x128xf32>
    %cst_52 = arith.constant dense<0.000000e+00> : vector<8x128xf32>
    %124 = tpu.matmul %2, %123, %cst_52 {dimension_numbers = #tpu.dot_dimension_numbers<[1], [0], [0], [1], [0, 0, 1, 1], [], []>} : vector<8x8xf32>, vector<8x128xf32>, vector<8x128xf32> -> vector<8x128xf32>
    %125 = vector.broadcast %3 : vector<8x1xf32> to vector<8x128xf32>
    %126 = arith.addf %124, %125 : vector<8x128xf32>
    %cst_53 = arith.constant 0.000000e+00 : f32
    %127 = vector.broadcast %cst_53 : f32 to vector<8x128xf32>
    %128 = arith.maximumf %126, %127 : vector<8x128xf32>
    %cst_54 = arith.constant dense<0.000000e+00> : vector<8x128xf32>
    %129 = tpu.matmul %4, %128, %cst_54 {dimension_numbers = #tpu.dot_dimension_numbers<[1], [0], [0], [1], [0, 0, 1, 1], [], []>} : vector<8x8xf32>, vector<8x128xf32>, vector<8x128xf32> -> vector<8x128xf32>
    %130 = vector.broadcast %5 : vector<8x1xf32> to vector<8x128xf32>
    %131 = arith.addf %129, %130 : vector<8x128xf32>
    %132 = arith.negf %131 : vector<8x128xf32>
    %133 = math.exp %132 : vector<8x128xf32>
    %cst_55 = arith.constant 1.000000e+00 : f32
    %134 = vector.broadcast %cst_55 : f32 to vector<8x128xf32>
    %135 = arith.addf %134, %133 : vector<8x128xf32>
    %136 = arith.divf %134, %135 : vector<8x128xf32>
    %137 = vector.broadcast %104 : vector<1x128xf32> to vector<8x128xf32>
    %138 = arith.mulf %136, %137 : vector<8x128xf32>
    %cst_56 = arith.constant dense<0.000000e+00> : vector<8xf32>
    %139 = vector.multi_reduction <add>, %138, %cst_56 [1] : vector<8x128xf32> to vector<8xf32>
    %140 = vector.shape_cast %139 : vector<8xf32> to vector<8x1xf32>
    %141 = arith.addf %100, %140 : vector<8x1xf32>
    %c1_i32_57 = arith.constant 1 : i32
    %142 = vector.extract_strided_slice %141 {offsets = [0, 0], sizes = [4, 1], strides = [1, 1]} : vector<8x1xf32> to vector<4x1xf32>
    %143 = vector.shape_cast %142 : vector<4x1xf32> to vector<4xf32>
    %c0_58 = arith.constant 0 : index
    %c0_59 = arith.constant 0 : index
    %c2_60 = arith.constant 2 : index
    %c0_61 = arith.constant 0 : index
    %144 = vector.load %arg10[%c0_58, %c0_59, %c2_60, %c0_61] : memref<1x1x8x4xf32, #tpu.memory_space<vmem>>, vector<1x1x1x4xf32>
    %145 = vector.shape_cast %144 : vector<1x1x1x4xf32> to vector<4xf32>
    %146 = vector.shape_cast %143 : vector<4xf32> to vector<1x1x1x4xf32>
    tpu.vector_store %arg10[%c0_58, %c0_59, %c2_60, %c0_61], %146 {strides = array<i32>} : memref<1x1x8x4xf32, #tpu.memory_space<vmem>>, vector<1x1x1x4xf32>,
    %cst_62 = arith.constant 0.000000e+00 : f32
    %147 = vector.broadcast %cst_62 : f32 to vector<8x1xf32>
    %c0_i32_63 = arith.constant 0 : i32
    %c128_i32_64 = arith.constant 128 : i32
    %148 = arith.muli %c0_i32_63, %c128_i32_64 : i32
    %149 = tpu.assume_multiple %148, 128 : i32
    %c3 = arith.constant 3 : index
    %150 = arith.index_cast %149 : i32 to index
    %151 = vector.load %arg3[%c3, %150] : memref<8x128xf32, #tpu.memory_space<vmem>>, vector<1x128xf32>
    %c3_65 = arith.constant 3 : index
    %c0_66 = arith.constant 0 : index
    %152 = arith.index_cast %149 : i32 to index
    %153 = vector.load %arg2[%c3_65, %c0_66, %152] : memref<8x2x128xf32, #tpu.memory_space<vmem>>, vector<1x1x128xf32>
    %154 = vector.shape_cast %153 : vector<1x1x128xf32> to vector<1x128xf32>
    %155 = vector.extract_strided_slice %0 {offsets = [0, 0], sizes = [8, 1], strides = [1, 1]} : vector<8x2xf32> to vector<8x1xf32>
    %156 = vector.broadcast %155 : vector<8x1xf32> to vector<8x128xf32>
    %157 = vector.broadcast %154 : vector<1x128xf32> to vector<8x128xf32>
    %158 = arith.mulf %156, %157 : vector<8x128xf32>
    %159 = vector.broadcast %1 : vector<8x1xf32> to vector<8x128xf32>
    %160 = arith.addf %159, %158 : vector<8x128xf32>
    %c3_67 = arith.constant 3 : index
    %c1_68 = arith.constant 1 : index
    %161 = arith.index_cast %149 : i32 to index
    %162 = vector.load %arg2[%c3_67, %c1_68, %161] : memref<8x2x128xf32, #tpu.memory_space<vmem>>, vector<1x1x128xf32>
    %163 = vector.shape_cast %162 : vector<1x1x128xf32> to vector<1x128xf32>
    %164 = vector.extract_strided_slice %0 {offsets = [0, 1], sizes = [8, 1], strides = [1, 1]} : vector<8x2xf32> to vector<8x1xf32>
    %165 = vector.broadcast %164 : vector<8x1xf32> to vector<8x128xf32>
    %166 = vector.broadcast %163 : vector<1x128xf32> to vector<8x128xf32>
    %167 = arith.mulf %165, %166 : vector<8x128xf32>
    %168 = arith.addf %160, %167 : vector<8x128xf32>
    %cst_69 = arith.constant 0.000000e+00 : f32
    %169 = vector.broadcast %cst_69 : f32 to vector<8x128xf32>
    %170 = arith.maximumf %168, %169 : vector<8x128xf32>
    %cst_70 = arith.constant dense<0.000000e+00> : vector<8x128xf32>
    %171 = tpu.matmul %2, %170, %cst_70 {dimension_numbers = #tpu.dot_dimension_numbers<[1], [0], [0], [1], [0, 0, 1, 1], [], []>} : vector<8x8xf32>, vector<8x128xf32>, vector<8x128xf32> -> vector<8x128xf32>
    %172 = vector.broadcast %3 : vector<8x1xf32> to vector<8x128xf32>
    %173 = arith.addf %171, %172 : vector<8x128xf32>
    %cst_71 = arith.constant 0.000000e+00 : f32
    %174 = vector.broadcast %cst_71 : f32 to vector<8x128xf32>
    %175 = arith.maximumf %173, %174 : vector<8x128xf32>
    %cst_72 = arith.constant dense<0.000000e+00> : vector<8x128xf32>
    %176 = tpu.matmul %4, %175, %cst_72 {dimension_numbers = #tpu.dot_dimension_numbers<[1], [0], [0], [1], [0, 0, 1, 1], [], []>} : vector<8x8xf32>, vector<8x128xf32>, vector<8x128xf32> -> vector<8x128xf32>
    %177 = vector.broadcast %5 : vector<8x1xf32> to vector<8x128xf32>
    %178 = arith.addf %176, %177 : vector<8x128xf32>
    %179 = arith.negf %178 : vector<8x128xf32>
    %180 = math.exp %179 : vector<8x128xf32>
    %cst_73 = arith.constant 1.000000e+00 : f32
    %181 = vector.broadcast %cst_73 : f32 to vector<8x128xf32>
    %182 = arith.addf %181, %180 : vector<8x128xf32>
    %183 = arith.divf %181, %182 : vector<8x128xf32>
    %184 = vector.broadcast %151 : vector<1x128xf32> to vector<8x128xf32>
    %185 = arith.mulf %183, %184 : vector<8x128xf32>
    %cst_74 = arith.constant dense<0.000000e+00> : vector<8xf32>
    %186 = vector.multi_reduction <add>, %185, %cst_74 [1] : vector<8x128xf32> to vector<8xf32>
    %187 = vector.shape_cast %186 : vector<8xf32> to vector<8x1xf32>
    %188 = arith.addf %147, %187 : vector<8x1xf32>
    %c1_i32_75 = arith.constant 1 : i32
    %189 = vector.extract_strided_slice %188 {offsets = [0, 0], sizes = [4, 1], strides = [1, 1]} : vector<8x1xf32> to vector<4x1xf32>
    %190 = vector.shape_cast %189 : vector<4x1xf32> to vector<4xf32>
    %c0_76 = arith.constant 0 : index
    %c0_77 = arith.constant 0 : index
    %c3_78 = arith.constant 3 : index
    %c0_79 = arith.constant 0 : index
    %191 = vector.load %arg10[%c0_76, %c0_77, %c3_78, %c0_79] : memref<1x1x8x4xf32, #tpu.memory_space<vmem>>, vector<1x1x1x4xf32>
    %192 = vector.shape_cast %191 : vector<1x1x1x4xf32> to vector<4xf32>
    %193 = vector.shape_cast %190 : vector<4xf32> to vector<1x1x1x4xf32>
    tpu.vector_store %arg10[%c0_76, %c0_77, %c3_78, %c0_79], %193 {strides = array<i32>} : memref<1x1x8x4xf32, #tpu.memory_space<vmem>>, vector<1x1x1x4xf32>,
    %cst_80 = arith.constant 0.000000e+00 : f32
    %194 = vector.broadcast %cst_80 : f32 to vector<8x1xf32>
    %c0_i32_81 = arith.constant 0 : i32
    %c128_i32_82 = arith.constant 128 : i32
    %195 = arith.muli %c0_i32_81, %c128_i32_82 : i32
    %196 = tpu.assume_multiple %195, 128 : i32
    %c4 = arith.constant 4 : index
    %197 = arith.index_cast %196 : i32 to index
    %198 = vector.load %arg3[%c4, %197] : memref<8x128xf32, #tpu.memory_space<vmem>>, vector<1x128xf32>
    %c4_83 = arith.constant 4 : index
    %c0_84 = arith.constant 0 : index
    %199 = arith.index_cast %196 : i32 to index
    %200 = vector.load %arg2[%c4_83, %c0_84, %199] : memref<8x2x128xf32, #tpu.memory_space<vmem>>, vector<1x1x128xf32>
    %201 = vector.shape_cast %200 : vector<1x1x128xf32> to vector<1x128xf32>
    %202 = vector.extract_strided_slice %0 {offsets = [0, 0], sizes = [8, 1], strides = [1, 1]} : vector<8x2xf32> to vector<8x1xf32>
    %203 = vector.broadcast %202 : vector<8x1xf32> to vector<8x128xf32>
    %204 = vector.broadcast %201 : vector<1x128xf32> to vector<8x128xf32>
    %205 = arith.mulf %203, %204 : vector<8x128xf32>
    %206 = vector.broadcast %1 : vector<8x1xf32> to vector<8x128xf32>
    %207 = arith.addf %206, %205 : vector<8x128xf32>
    %c4_85 = arith.constant 4 : index
    %c1_86 = arith.constant 1 : index
    %208 = arith.index_cast %196 : i32 to index
    %209 = vector.load %arg2[%c4_85, %c1_86, %208] : memref<8x2x128xf32, #tpu.memory_space<vmem>>, vector<1x1x128xf32>
    %210 = vector.shape_cast %209 : vector<1x1x128xf32> to vector<1x128xf32>
    %211 = vector.extract_strided_slice %0 {offsets = [0, 1], sizes = [8, 1], strides = [1, 1]} : vector<8x2xf32> to vector<8x1xf32>
    %212 = vector.broadcast %211 : vector<8x1xf32> to vector<8x128xf32>
    %213 = vector.broadcast %210 : vector<1x128xf32> to vector<8x128xf32>
    %214 = arith.mulf %212, %213 : vector<8x128xf32>
    %215 = arith.addf %207, %214 : vector<8x128xf32>
    %cst_87 = arith.constant 0.000000e+00 : f32
    %216 = vector.broadcast %cst_87 : f32 to vector<8x128xf32>
    %217 = arith.maximumf %215, %216 : vector<8x128xf32>
    %cst_88 = arith.constant dense<0.000000e+00> : vector<8x128xf32>
    %218 = tpu.matmul %2, %217, %cst_88 {dimension_numbers = #tpu.dot_dimension_numbers<[1], [0], [0], [1], [0, 0, 1, 1], [], []>} : vector<8x8xf32>, vector<8x128xf32>, vector<8x128xf32> -> vector<8x128xf32>
    %219 = vector.broadcast %3 : vector<8x1xf32> to vector<8x128xf32>
    %220 = arith.addf %218, %219 : vector<8x128xf32>
    %cst_89 = arith.constant 0.000000e+00 : f32
    %221 = vector.broadcast %cst_89 : f32 to vector<8x128xf32>
    %222 = arith.maximumf %220, %221 : vector<8x128xf32>
    %cst_90 = arith.constant dense<0.000000e+00> : vector<8x128xf32>
    %223 = tpu.matmul %4, %222, %cst_90 {dimension_numbers = #tpu.dot_dimension_numbers<[1], [0], [0], [1], [0, 0, 1, 1], [], []>} : vector<8x8xf32>, vector<8x128xf32>, vector<8x128xf32> -> vector<8x128xf32>
    %224 = vector.broadcast %5 : vector<8x1xf32> to vector<8x128xf32>
    %225 = arith.addf %223, %224 : vector<8x128xf32>
    %226 = arith.negf %225 : vector<8x128xf32>
    %227 = math.exp %226 : vector<8x128xf32>
    %cst_91 = arith.constant 1.000000e+00 : f32
    %228 = vector.broadcast %cst_91 : f32 to vector<8x128xf32>
    %229 = arith.addf %228, %227 : vector<8x128xf32>
    %230 = arith.divf %228, %229 : vector<8x128xf32>
    %231 = vector.broadcast %198 : vector<1x128xf32> to vector<8x128xf32>
    %232 = arith.mulf %230, %231 : vector<8x128xf32>
    %cst_92 = arith.constant dense<0.000000e+00> : vector<8xf32>
    %233 = vector.multi_reduction <add>, %232, %cst_92 [1] : vector<8x128xf32> to vector<8xf32>
    %234 = vector.shape_cast %233 : vector<8xf32> to vector<8x1xf32>
    %235 = arith.addf %194, %234 : vector<8x1xf32>
    %c1_i32_93 = arith.constant 1 : i32
    %236 = vector.extract_strided_slice %235 {offsets = [0, 0], sizes = [4, 1], strides = [1, 1]} : vector<8x1xf32> to vector<4x1xf32>
    %237 = vector.shape_cast %236 : vector<4x1xf32> to vector<4xf32>
    %c0_94 = arith.constant 0 : index
    %c0_95 = arith.constant 0 : index
    %c4_96 = arith.constant 4 : index
    %c0_97 = arith.constant 0 : index
    %238 = vector.load %arg10[%c0_94, %c0_95, %c4_96, %c0_97] : memref<1x1x8x4xf32, #tpu.memory_space<vmem>>, vector<1x1x1x4xf32>
    %239 = vector.shape_cast %238 : vector<1x1x1x4xf32> to vector<4xf32>
    %240 = vector.shape_cast %237 : vector<4xf32> to vector<1x1x1x4xf32>
    tpu.vector_store %arg10[%c0_94, %c0_95, %c4_96, %c0_97], %240 {strides = array<i32>} : memref<1x1x8x4xf32, #tpu.memory_space<vmem>>, vector<1x1x1x4xf32>,
    %cst_98 = arith.constant 0.000000e+00 : f32
    %241 = vector.broadcast %cst_98 : f32 to vector<8x1xf32>
    %c0_i32_99 = arith.constant 0 : i32
    %c128_i32_100 = arith.constant 128 : i32
    %242 = arith.muli %c0_i32_99, %c128_i32_100 : i32
    %243 = tpu.assume_multiple %242, 128 : i32
    %c5 = arith.constant 5 : index
    %244 = arith.index_cast %243 : i32 to index
    %245 = vector.load %arg3[%c5, %244] : memref<8x128xf32, #tpu.memory_space<vmem>>, vector<1x128xf32>
    %c5_101 = arith.constant 5 : index
    %c0_102 = arith.constant 0 : index
    %246 = arith.index_cast %243 : i32 to index
    %247 = vector.load %arg2[%c5_101, %c0_102, %246] : memref<8x2x128xf32, #tpu.memory_space<vmem>>, vector<1x1x128xf32>
    %248 = vector.shape_cast %247 : vector<1x1x128xf32> to vector<1x128xf32>
    %249 = vector.extract_strided_slice %0 {offsets = [0, 0], sizes = [8, 1], strides = [1, 1]} : vector<8x2xf32> to vector<8x1xf32>
    %250 = vector.broadcast %249 : vector<8x1xf32> to vector<8x128xf32>
    %251 = vector.broadcast %248 : vector<1x128xf32> to vector<8x128xf32>
    %252 = arith.mulf %250, %251 : vector<8x128xf32>
    %253 = vector.broadcast %1 : vector<8x1xf32> to vector<8x128xf32>
    %254 = arith.addf %253, %252 : vector<8x128xf32>
    %c5_103 = arith.constant 5 : index
    %c1_104 = arith.constant 1 : index
    %255 = arith.index_cast %243 : i32 to index
    %256 = vector.load %arg2[%c5_103, %c1_104, %255] : memref<8x2x128xf32, #tpu.memory_space<vmem>>, vector<1x1x128xf32>
    %257 = vector.shape_cast %256 : vector<1x1x128xf32> to vector<1x128xf32>
    %258 = vector.extract_strided_slice %0 {offsets = [0, 1], sizes = [8, 1], strides = [1, 1]} : vector<8x2xf32> to vector<8x1xf32>
    %259 = vector.broadcast %258 : vector<8x1xf32> to vector<8x128xf32>
    %260 = vector.broadcast %257 : vector<1x128xf32> to vector<8x128xf32>
    %261 = arith.mulf %259, %260 : vector<8x128xf32>
    %262 = arith.addf %254, %261 : vector<8x128xf32>
    %cst_105 = arith.constant 0.000000e+00 : f32
    %263 = vector.broadcast %cst_105 : f32 to vector<8x128xf32>
    %264 = arith.maximumf %262, %263 : vector<8x128xf32>
    %cst_106 = arith.constant dense<0.000000e+00> : vector<8x128xf32>
    %265 = tpu.matmul %2, %264, %cst_106 {dimension_numbers = #tpu.dot_dimension_numbers<[1], [0], [0], [1], [0, 0, 1, 1], [], []>} : vector<8x8xf32>, vector<8x128xf32>, vector<8x128xf32> -> vector<8x128xf32>
    %266 = vector.broadcast %3 : vector<8x1xf32> to vector<8x128xf32>
    %267 = arith.addf %265, %266 : vector<8x128xf32>
    %cst_107 = arith.constant 0.000000e+00 : f32
    %268 = vector.broadcast %cst_107 : f32 to vector<8x128xf32>
    %269 = arith.maximumf %267, %268 : vector<8x128xf32>
    %cst_108 = arith.constant dense<0.000000e+00> : vector<8x128xf32>
    %270 = tpu.matmul %4, %269, %cst_108 {dimension_numbers = #tpu.dot_dimension_numbers<[1], [0], [0], [1], [0, 0, 1, 1], [], []>} : vector<8x8xf32>, vector<8x128xf32>, vector<8x128xf32> -> vector<8x128xf32>
    %271 = vector.broadcast %5 : vector<8x1xf32> to vector<8x128xf32>
    %272 = arith.addf %270, %271 : vector<8x128xf32>
    %273 = arith.negf %272 : vector<8x128xf32>
    %274 = math.exp %273 : vector<8x128xf32>
    %cst_109 = arith.constant 1.000000e+00 : f32
    %275 = vector.broadcast %cst_109 : f32 to vector<8x128xf32>
    %276 = arith.addf %275, %274 : vector<8x128xf32>
    %277 = arith.divf %275, %276 : vector<8x128xf32>
    %278 = vector.broadcast %245 : vector<1x128xf32> to vector<8x128xf32>
    %279 = arith.mulf %277, %278 : vector<8x128xf32>
    %cst_110 = arith.constant dense<0.000000e+00> : vector<8xf32>
    %280 = vector.multi_reduction <add>, %279, %cst_110 [1] : vector<8x128xf32> to vector<8xf32>
    %281 = vector.shape_cast %280 : vector<8xf32> to vector<8x1xf32>
    %282 = arith.addf %241, %281 : vector<8x1xf32>
    %c1_i32_111 = arith.constant 1 : i32
    %283 = vector.extract_strided_slice %282 {offsets = [0, 0], sizes = [4, 1], strides = [1, 1]} : vector<8x1xf32> to vector<4x1xf32>
    %284 = vector.shape_cast %283 : vector<4x1xf32> to vector<4xf32>
    %c0_112 = arith.constant 0 : index
    %c0_113 = arith.constant 0 : index
    %c5_114 = arith.constant 5 : index
    %c0_115 = arith.constant 0 : index
    %285 = vector.load %arg10[%c0_112, %c0_113, %c5_114, %c0_115] : memref<1x1x8x4xf32, #tpu.memory_space<vmem>>, vector<1x1x1x4xf32>
    %286 = vector.shape_cast %285 : vector<1x1x1x4xf32> to vector<4xf32>
    %287 = vector.shape_cast %284 : vector<4xf32> to vector<1x1x1x4xf32>
    tpu.vector_store %arg10[%c0_112, %c0_113, %c5_114, %c0_115], %287 {strides = array<i32>} : memref<1x1x8x4xf32, #tpu.memory_space<vmem>>, vector<1x1x1x4xf32>,
    %cst_116 = arith.constant 0.000000e+00 : f32
    %288 = vector.broadcast %cst_116 : f32 to vector<8x1xf32>
    %c0_i32_117 = arith.constant 0 : i32
    %c128_i32_118 = arith.constant 128 : i32
    %289 = arith.muli %c0_i32_117, %c128_i32_118 : i32
    %290 = tpu.assume_multiple %289, 128 : i32
    %c6 = arith.constant 6 : index
    %291 = arith.index_cast %290 : i32 to index
    %292 = vector.load %arg3[%c6, %291] : memref<8x128xf32, #tpu.memory_space<vmem>>, vector<1x128xf32>
    %c6_119 = arith.constant 6 : index
    %c0_120 = arith.constant 0 : index
    %293 = arith.index_cast %290 : i32 to index
    %294 = vector.load %arg2[%c6_119, %c0_120, %293] : memref<8x2x128xf32, #tpu.memory_space<vmem>>, vector<1x1x128xf32>
    %295 = vector.shape_cast %294 : vector<1x1x128xf32> to vector<1x128xf32>
    %296 = vector.extract_strided_slice %0 {offsets = [0, 0], sizes = [8, 1], strides = [1, 1]} : vector<8x2xf32> to vector<8x1xf32>
    %297 = vector.broadcast %296 : vector<8x1xf32> to vector<8x128xf32>
    %298 = vector.broadcast %295 : vector<1x128xf32> to vector<8x128xf32>
    %299 = arith.mulf %297, %298 : vector<8x128xf32>
    %300 = vector.broadcast %1 : vector<8x1xf32> to vector<8x128xf32>
    %301 = arith.addf %300, %299 : vector<8x128xf32>
    %c6_121 = arith.constant 6 : index
    %c1_122 = arith.constant 1 : index
    %302 = arith.index_cast %290 : i32 to index
    %303 = vector.load %arg2[%c6_121, %c1_122, %302] : memref<8x2x128xf32, #tpu.memory_space<vmem>>, vector<1x1x128xf32>
    %304 = vector.shape_cast %303 : vector<1x1x128xf32> to vector<1x128xf32>
    %305 = vector.extract_strided_slice %0 {offsets = [0, 1], sizes = [8, 1], strides = [1, 1]} : vector<8x2xf32> to vector<8x1xf32>
    %306 = vector.broadcast %305 : vector<8x1xf32> to vector<8x128xf32>
    %307 = vector.broadcast %304 : vector<1x128xf32> to vector<8x128xf32>
    %308 = arith.mulf %306, %307 : vector<8x128xf32>
    %309 = arith.addf %301, %308 : vector<8x128xf32>
    %cst_123 = arith.constant 0.000000e+00 : f32
    %310 = vector.broadcast %cst_123 : f32 to vector<8x128xf32>
    %311 = arith.maximumf %309, %310 : vector<8x128xf32>
    %cst_124 = arith.constant dense<0.000000e+00> : vector<8x128xf32>
    %312 = tpu.matmul %2, %311, %cst_124 {dimension_numbers = #tpu.dot_dimension_numbers<[1], [0], [0], [1], [0, 0, 1, 1], [], []>} : vector<8x8xf32>, vector<8x128xf32>, vector<8x128xf32> -> vector<8x128xf32>
    %313 = vector.broadcast %3 : vector<8x1xf32> to vector<8x128xf32>
    %314 = arith.addf %312, %313 : vector<8x128xf32>
    %cst_125 = arith.constant 0.000000e+00 : f32
    %315 = vector.broadcast %cst_125 : f32 to vector<8x128xf32>
    %316 = arith.maximumf %314, %315 : vector<8x128xf32>
    %cst_126 = arith.constant dense<0.000000e+00> : vector<8x128xf32>
    %317 = tpu.matmul %4, %316, %cst_126 {dimension_numbers = #tpu.dot_dimension_numbers<[1], [0], [0], [1], [0, 0, 1, 1], [], []>} : vector<8x8xf32>, vector<8x128xf32>, vector<8x128xf32> -> vector<8x128xf32>
    %318 = vector.broadcast %5 : vector<8x1xf32> to vector<8x128xf32>
    %319 = arith.addf %317, %318 : vector<8x128xf32>
    %320 = arith.negf %319 : vector<8x128xf32>
    %321 = math.exp %320 : vector<8x128xf32>
    %cst_127 = arith.constant 1.000000e+00 : f32
    %322 = vector.broadcast %cst_127 : f32 to vector<8x128xf32>
    %323 = arith.addf %322, %321 : vector<8x128xf32>
    %324 = arith.divf %322, %323 : vector<8x128xf32>
    %325 = vector.broadcast %292 : vector<1x128xf32> to vector<8x128xf32>
    %326 = arith.mulf %324, %325 : vector<8x128xf32>
    %cst_128 = arith.constant dense<0.000000e+00> : vector<8xf32>
    %327 = vector.multi_reduction <add>, %326, %cst_128 [1] : vector<8x128xf32> to vector<8xf32>
    %328 = vector.shape_cast %327 : vector<8xf32> to vector<8x1xf32>
    %329 = arith.addf %288, %328 : vector<8x1xf32>
    %c1_i32_129 = arith.constant 1 : i32
    %330 = vector.extract_strided_slice %329 {offsets = [0, 0], sizes = [4, 1], strides = [1, 1]} : vector<8x1xf32> to vector<4x1xf32>
    %331 = vector.shape_cast %330 : vector<4x1xf32> to vector<4xf32>
    %c0_130 = arith.constant 0 : index
    %c0_131 = arith.constant 0 : index
    %c6_132 = arith.constant 6 : index
    %c0_133 = arith.constant 0 : index
    %332 = vector.load %arg10[%c0_130, %c0_131, %c6_132, %c0_133] : memref<1x1x8x4xf32, #tpu.memory_space<vmem>>, vector<1x1x1x4xf32>
    %333 = vector.shape_cast %332 : vector<1x1x1x4xf32> to vector<4xf32>
    %334 = vector.shape_cast %331 : vector<4xf32> to vector<1x1x1x4xf32>
    tpu.vector_store %arg10[%c0_130, %c0_131, %c6_132, %c0_133], %334 {strides = array<i32>} : memref<1x1x8x4xf32, #tpu.memory_space<vmem>>, vector<1x1x1x4xf32>,
    %cst_134 = arith.constant 0.000000e+00 : f32
    %335 = vector.broadcast %cst_134 : f32 to vector<8x1xf32>
    %c0_i32_135 = arith.constant 0 : i32
    %c128_i32_136 = arith.constant 128 : i32
    %336 = arith.muli %c0_i32_135, %c128_i32_136 : i32
    %337 = tpu.assume_multiple %336, 128 : i32
    %c7 = arith.constant 7 : index
    %338 = arith.index_cast %337 : i32 to index
    %339 = vector.load %arg3[%c7, %338] : memref<8x128xf32, #tpu.memory_space<vmem>>, vector<1x128xf32>
    %c7_137 = arith.constant 7 : index
    %c0_138 = arith.constant 0 : index
    %340 = arith.index_cast %337 : i32 to index
    %341 = vector.load %arg2[%c7_137, %c0_138, %340] : memref<8x2x128xf32, #tpu.memory_space<vmem>>, vector<1x1x128xf32>
    %342 = vector.shape_cast %341 : vector<1x1x128xf32> to vector<1x128xf32>
    %343 = vector.extract_strided_slice %0 {offsets = [0, 0], sizes = [8, 1], strides = [1, 1]} : vector<8x2xf32> to vector<8x1xf32>
    %344 = vector.broadcast %343 : vector<8x1xf32> to vector<8x128xf32>
    %345 = vector.broadcast %342 : vector<1x128xf32> to vector<8x128xf32>
    %346 = arith.mulf %344, %345 : vector<8x128xf32>
    %347 = vector.broadcast %1 : vector<8x1xf32> to vector<8x128xf32>
    %348 = arith.addf %347, %346 : vector<8x128xf32>
    %c7_139 = arith.constant 7 : index
    %c1_140 = arith.constant 1 : index
    %349 = arith.index_cast %337 : i32 to index
    %350 = vector.load %arg2[%c7_139, %c1_140, %349] : memref<8x2x128xf32, #tpu.memory_space<vmem>>, vector<1x1x128xf32>
    %351 = vector.shape_cast %350 : vector<1x1x128xf32> to vector<1x128xf32>
    %352 = vector.extract_strided_slice %0 {offsets = [0, 1], sizes = [8, 1], strides = [1, 1]} : vector<8x2xf32> to vector<8x1xf32>
    %353 = vector.broadcast %352 : vector<8x1xf32> to vector<8x128xf32>
    %354 = vector.broadcast %351 : vector<1x128xf32> to vector<8x128xf32>
    %355 = arith.mulf %353, %354 : vector<8x128xf32>
    %356 = arith.addf %348, %355 : vector<8x128xf32>
    %cst_141 = arith.constant 0.000000e+00 : f32
    %357 = vector.broadcast %cst_141 : f32 to vector<8x128xf32>
    %358 = arith.maximumf %356, %357 : vector<8x128xf32>
    %cst_142 = arith.constant dense<0.000000e+00> : vector<8x128xf32>
    %359 = tpu.matmul %2, %358, %cst_142 {dimension_numbers = #tpu.dot_dimension_numbers<[1], [0], [0], [1], [0, 0, 1, 1], [], []>} : vector<8x8xf32>, vector<8x128xf32>, vector<8x128xf32> -> vector<8x128xf32>
    %360 = vector.broadcast %3 : vector<8x1xf32> to vector<8x128xf32>
    %361 = arith.addf %359, %360 : vector<8x128xf32>
    %cst_143 = arith.constant 0.000000e+00 : f32
    %362 = vector.broadcast %cst_143 : f32 to vector<8x128xf32>
    %363 = arith.maximumf %361, %362 : vector<8x128xf32>
    %cst_144 = arith.constant dense<0.000000e+00> : vector<8x128xf32>
    %364 = tpu.matmul %4, %363, %cst_144 {dimension_numbers = #tpu.dot_dimension_numbers<[1], [0], [0], [1], [0, 0, 1, 1], [], []>} : vector<8x8xf32>, vector<8x128xf32>, vector<8x128xf32> -> vector<8x128xf32>
    %365 = vector.broadcast %5 : vector<8x1xf32> to vector<8x128xf32>
    %366 = arith.addf %364, %365 : vector<8x128xf32>
    %367 = arith.negf %366 : vector<8x128xf32>
    %368 = math.exp %367 : vector<8x128xf32>
    %cst_145 = arith.constant 1.000000e+00 : f32
    %369 = vector.broadcast %cst_145 : f32 to vector<8x128xf32>
    %370 = arith.addf %369, %368 : vector<8x128xf32>
    %371 = arith.divf %369, %370 : vector<8x128xf32>
    %372 = vector.broadcast %339 : vector<1x128xf32> to vector<8x128xf32>
    %373 = arith.mulf %371, %372 : vector<8x128xf32>
    %cst_146 = arith.constant dense<0.000000e+00> : vector<8xf32>
    %374 = vector.multi_reduction <add>, %373, %cst_146 [1] : vector<8x128xf32> to vector<8xf32>
    %375 = vector.shape_cast %374 : vector<8xf32> to vector<8x1xf32>
    %376 = arith.addf %335, %375 : vector<8x1xf32>
    %c1_i32_147 = arith.constant 1 : i32
    %377 = vector.extract_strided_slice %376 {offsets = [0, 0], sizes = [4, 1], strides = [1, 1]} : vector<8x1xf32> to vector<4x1xf32>
    %378 = vector.shape_cast %377 : vector<4x1xf32> to vector<4xf32>
    %c0_148 = arith.constant 0 : index
    %c0_149 = arith.constant 0 : index
    %c7_150 = arith.constant 7 : index
    %c0_151 = arith.constant 0 : index
    %379 = vector.load %arg10[%c0_148, %c0_149, %c7_150, %c0_151] : memref<1x1x8x4xf32, #tpu.memory_space<vmem>>, vector<1x1x1x4xf32>
    %380 = vector.shape_cast %379 : vector<1x1x1x4xf32> to vector<4xf32>
    %381 = vector.shape_cast %378 : vector<4xf32> to vector<1x1x1x4xf32>
    tpu.vector_store %arg10[%c0_148, %c0_149, %c7_150, %c0_151], %381 {strides = array<i32>} : memref<1x1x8x4xf32, #tpu.memory_space<vmem>>, vector<1x1x1x4xf32>,
    return
  }
  func.func @transform_0(%arg0: i32, %arg1: i32) -> (i32, i32, i32) {
    %c0_i32 = arith.constant 0 : i32
    %c0_i32_0 = arith.constant 0 : i32
    return %arg0, %c0_i32, %arg1 : i32, i32, i32
  }
  func.func @transform_1(%arg0: i32, %arg1: i32) -> (i32, i32) {
    %c0_i32 = arith.constant 0 : i32
    return %arg0, %arg1 : i32, i32
  }
  func.func @transform_2(%arg0: i32, %arg1: i32) -> (i32, i32) {
    %c0_i32 = arith.constant 0 : i32
    %c0_i32_0 = arith.constant 0 : i32
    %c0_i32_1 = arith.constant 0 : i32
    return %c0_i32, %c0_i32_0 : i32, i32
  }
  func.func @transform_3(%arg0: i32, %arg1: i32) -> (i32, i32) {
    %c0_i32 = arith.constant 0 : i32
    %c0_i32_0 = arith.constant 0 : i32
    %c0_i32_1 = arith.constant 0 : i32
    return %c0_i32, %c0_i32_0 : i32, i32
  }
  func.func @transform_4(%arg0: i32, %arg1: i32) -> (i32, i32) {
    %c0_i32 = arith.constant 0 : i32
    %c0_i32_0 = arith.constant 0 : i32
    %c0_i32_1 = arith.constant 0 : i32
    return %c0_i32, %c0_i32_0 : i32, i32
  }
  func.func @transform_5(%arg0: i32, %arg1: i32) -> (i32, i32) {
    %c0_i32 = arith.constant 0 : i32
    %c0_i32_0 = arith.constant 0 : i32
    %c0_i32_1 = arith.constant 0 : i32
    return %c0_i32, %c0_i32_0 : i32, i32
  }
  func.func @transform_6(%arg0: i32, %arg1: i32) -> (i32, i32) {
    %c0_i32 = arith.constant 0 : i32
    %c0_i32_0 = arith.constant 0 : i32
    %c0_i32_1 = arith.constant 0 : i32
    return %c0_i32, %c0_i32_0 : i32, i32
  }
  func.func @transform_7(%arg0: i32, %arg1: i32) -> (i32, i32) {
    %c0_i32 = arith.constant 0 : i32
    %c0_i32_0 = arith.constant 0 : i32
    %c0_i32_1 = arith.constant 0 : i32
    return %c0_i32, %c0_i32_0 : i32, i32
  }
  func.func @transform_8(%arg0: i32, %arg1: i32) -> (i32, i32, i32, i32) {
    %c0_i32 = arith.constant 0 : i32
    %c0_i32_0 = arith.constant 0 : i32
    %c0_i32_1 = arith.constant 0 : i32
    return %arg0, %arg1, %c0_i32, %c0_i32_0 : i32, i32, i32, i32
  }
}

</mosaic_0001>

<llo_original>
// kernel: tpu_custom_call.1
$region0: #{tpu_custom_call.1}
  #allocation0 [shape = 'u32[]', space=smem, size = 0x4, offset = 0x4, fixed_abs, tag = 'smem constant byte address 0x4 - core index']
  #allocation1 [shape = 'u32[144,128]{1,0:T(1,128)}', space=vmem, size = 0x12000, scoped, tag = 'internal scratch']
  %s0 = inlined_call_operand.vmem [shape: f32[8,2,128], index: 0, kind: input, shape index: {}]
  %s1 = inlined_call_operand.vmem [shape: f32[8,128], index: 1, kind: input, shape index: {}]
  %s2 = inlined_call_operand.vmem [shape: f32[8,2], index: 2, kind: input, shape index: {}]
  %s3 = inlined_call_operand.vmem [shape: f32[8,1], index: 3, kind: input, shape index: {}]
  %s4 = inlined_call_operand.vmem [shape: f32[8,8], index: 4, kind: input, shape index: {}]
  %s5 = inlined_call_operand.vmem [shape: f32[8,1], index: 5, kind: input, shape index: {}]
  %s6 = inlined_call_operand.vmem [shape: f32[8,8], index: 6, kind: input, shape index: {}]
  %s7 = inlined_call_operand.vmem [shape: f32[8,1], index: 7, kind: input, shape index: {}]
  %s8 = inlined_call_operand.vmem [shape: f32[1,1,8,4], index: 8, kind: output, shape index: {}]
  %s9 = sld [smem:[#allocation0]]
  $region42: #{tpu_custom_call.1} parent=0
    _
  %s11 = ssub.s32 1, %s9
  %s12 = scalar_select 0, %s11, %s9
  // Predicated region
  $region2: #{tpu_custom_call.1} parent=0 // pred_check
    _
  $region3: #{tpu_custom_call.1} parent=0 // pred_check_branch
    %14 = sbr.rel (0) target = $region5
  $region4: #{tpu_custom_call.1} parent=0 // pred_region
    _
  $region5: #{tpu_custom_call.1} parent=0 // pred_fallthru
    _
  // Predicated region
  $region6: #{tpu_custom_call.1} parent=0 // pred_check
    _
  $region7: #{tpu_custom_call.1} parent=0 // pred_check_branch
    %16 = sbr.rel (0) target = $region9
  $region8: #{tpu_custom_call.1} parent=0 // pred_region
    _
  $region9: #{tpu_custom_call.1} parent=0 // pred_fallthru
    _
  // Predicated region
  $region10: #{tpu_custom_call.1} parent=0 // pred_check
    _
  $region11: #{tpu_custom_call.1} parent=0 // pred_check_branch
    %18 = sbr.rel (0) target = $region13
  $region12: #{tpu_custom_call.1} parent=0 // pred_region
    _
  $region13: #{tpu_custom_call.1} parent=0 // pred_fallthru
    _
  // Predicated region
  $region14: #{tpu_custom_call.1} parent=0 // pred_check
    _
  $region15: #{tpu_custom_call.1} parent=0 // pred_check_branch
    %20 = sbr.rel (0) target = $region17
  $region16: #{tpu_custom_call.1} parent=0 // pred_region
    _
  $region17: #{tpu_custom_call.1} parent=0 // pred_fallthru
    _
  // Predicated region
  $region18: #{tpu_custom_call.1} parent=0 // pred_check
    _
  $region19: #{tpu_custom_call.1} parent=0 // pred_check_branch
    %22 = sbr.rel (0) target = $region21
  $region20: #{tpu_custom_call.1} parent=0 // pred_region
    _
  $region21: #{tpu_custom_call.1} parent=0 // pred_fallthru
    _
  // Predicated region
  $region22: #{tpu_custom_call.1} parent=0 // pred_check
    _
  $region23: #{tpu_custom_call.1} parent=0 // pred_check_branch
    %24 = sbr.rel (0) target = $region25
  $region24: #{tpu_custom_call.1} parent=0 // pred_region
    _
  $region25: #{tpu_custom_call.1} parent=0 // pred_fallthru
    _
  // Predicated region
  $region26: #{tpu_custom_call.1} parent=0 // pred_check
    _
  $region27: #{tpu_custom_call.1} parent=0 // pred_check_branch
    %26 = sbr.rel (0) target = $region29
  $region28: #{tpu_custom_call.1} parent=0 // pred_region
    _
  $region29: #{tpu_custom_call.1} parent=0 // pred_fallthru
    _
  // Predicated region
  $region30: #{tpu_custom_call.1} parent=0 // pred_check
    _
  $region31: #{tpu_custom_call.1} parent=0 // pred_check_branch
    %28 = sbr.rel (0) target = $region33
  $region32: #{tpu_custom_call.1} parent=0 // pred_region
    _
  $region33: #{tpu_custom_call.1} parent=0 // pred_fallthru
    _
  %v29 = vld [vmem:[%s2] sm:$0xff]
  %v30 = vld [vmem:[%s3] sm:$0xff]
  %v31 = vld [vmem:[%s4] sm:$0xff]
  %v32 = vld [vmem:[%s5] sm:$0xff]
  %v33 = vld [vmem:[%s6] sm:$0xff]
  %v34 = vld [vmem:[%s7] sm:$0xff]
  %v35 = vld [vmem:[%s1] sm:$0x1]
  %v36 = vld [vmem:[%s0] sm:$0x1]
  %38 = vset.pattern.permute.xlu0 0
  %39 = vperm.xlu0 %38, %v29
  %v40 = vpop.permute.xlu0 %39
  %v42 = vlaneseq
  %v43 = vshrl.u32 %v42, 7
  %v44 = vsub.s32 0, %v43
  %v45 = vrot.slane %v36, %v44
  %v46 = vmul.f32 %v40, %v45
  %48 = vset.pattern.permute.xlu0 0
  %49 = vperm.xlu0 %48, %v30
  %v50 = vpop.permute.xlu0 %49
  %v52 = vadd.f32 %v50, %v46
  %v53 = vld [vmem:[%s0 + $0x1] sm:$0x1]
  %54 = vset.pattern.permute.xlu0 1
  %55 = vperm.xlu0 %54, %v29
  %v56 = vpop.permute.xlu0 %55
  %v58 = vlaneseq
  %v59 = vshrl.u32 %v58, 7
  %v60 = vsub.s32 0, %v59
  %v61 = vrot.slane %v53, %v60
  %v62 = vmul.f32 %v56, %v61
  %v63 = vadd.f32 %v52, %v62
  %v64 = vmax.f32 %v63, 0.0
  %66 = vset.pattern.permute.xlu0 0
  %67 = vperm.xlu0 %66, %v32
  %v68 = vpop.permute.xlu0 %67
  %vm70 = vcmask 64512
  %v72 = vsel %vm70, %v31, 0
  %74 = vmatprep.subr.mxu0 0.0
  %75 = vmatpush1.msra.mxu0 0.0
  %76 = vmatprep.subr.mxu0 0.0
  %77 = vmatpush1.msra.mxu0 0.0
  %78 = vmatprep.subr.mxu0 0.0
  %79 = vmatpush1.msra.mxu0 0.0
  %80 = vmatprep.subr.mxu0 0.0
  %81 = vmatpush1.msra.mxu0 0.0
  %82 = vmatprep.subr.mxu0 0.0
  %83 = vmatpush1.msra.mxu0 0.0
  %84 = vmatprep.subr.mxu0 0.0
  %85 = vmatpush1.msra.mxu0 0.0
  %86 = vmatprep.subr.mxu0 0.0
  %87 = vmatpush1.msra.mxu0 0.0
  %88 = vmatprep.subr.mxu0 0.0
  %89 = vmatpush1.msra.mxu0 0.0
  %90 = vmatprep.subr.mxu0 0.0
  %91 = vmatpush1.msra.mxu0 0.0
  %92 = vmatprep.subr.mxu0 0.0
  %93 = vmatpush1.msra.mxu0 0.0
  %94 = vmatprep.subr.mxu0 0.0
  %95 = vmatpush1.msra.mxu0 0.0
  %96 = vmatprep.subr.mxu0 0.0
  %97 = vmatpush1.msra.mxu0 0.0
  %98 = vmatprep.subr.mxu0 0.0
  %99 = vmatpush1.msra.mxu0 0.0
  %100 = vmatprep.subr.mxu0 0.0
  %101 = vmatpush1.msra.mxu0 0.0
  %102 = vmatprep.subr.mxu0 0.0
  %103 = vmatpush1.msra.mxu0 0.0
  %104 = vmatprep.subr.mxu0 0.0
  %105 = vmatpush1.msra.mxu0 %v64
  %106 = vmatprep.subr.mxu0 0.0
  %107 = vmatpush2.msra.mxu0 0.0
  %108 = vmatprep.subr.mxu0 0.0
  %109 = vmatpush2.msra.mxu0 0.0
  %110 = vmatprep.subr.mxu0 0.0
  %111 = vmatpush2.msra.mxu0 0.0
  %112 = vmatprep.subr.mxu0 0.0
  %113 = vmatpush2.msra.mxu0 0.0
  %114 = vmatprep.subr.mxu0 0.0
  %115 = vmatpush2.msra.mxu0 0.0
  %116 = vmatprep.subr.mxu0 0.0
  %117 = vmatpush2.msra.mxu0 0.0
  %118 = vmatprep.subr.mxu0 0.0
  %119 = vmatpush2.msra.mxu0 0.0
  %120 = vmatprep.subr.mxu0 0.0
  %121 = vmatpush2.msra.mxu0 0.0
  %122 = vmatprep.subr.mxu0 0.0
  %123 = vmatpush2.msra.mxu0 0.0
  %124 = vmatprep.subr.mxu0 0.0
  %125 = vmatpush2.msra.mxu0 0.0
  %126 = vmatprep.subr.mxu0 0.0
  %127 = vmatpush2.msra.mxu0 0.0
  %128 = vmatprep.subr.mxu0 0.0
  %129 = vmatpush2.msra.mxu0 0.0
  %130 = vmatprep.subr.mxu0 0.0
  %131 = vmatpush2.msra.mxu0 0.0
  %132 = vmatprep.subr.mxu0 0.0
  %133 = vmatpush2.msra.mxu0 0.0
  %134 = vmatprep.subr.mxu0 0.0
  %135 = vmatpush2.msra.mxu0 0.0
  %136 = vmatprep.subr.mxu0 0.0
  %137 = vmatpush2.msra.mxu0 0.0
  %138 = vmatprep.mubr.f32.mxu0 0.0
  %139 = vmatmul.mubr.f32.gmra.mxu0 %v72
  %v140 = vpop.f32.mrf.mxu0
  %v141 = vadd.f32 %v68, %v140
  %v142 = vpop.f32.mrf.mxu0
  %143 = vdwg.mxu0
  %v144 = vmax.f32 %v141, 0.0
  %146 = vset.pattern.permute.xlu0 0
  %147 = vperm.xlu0 %146, %v34
  %v148 = vpop.permute.xlu0 %147
  %v151 = vsel %vm70, %v33, 0
  %153 = vmatprep.subr.mxu0 0.0
  %154 = vmatpush1.msra.mxu0 0.0
  %155 = vmatprep.subr.mxu0 0.0
  %156 = vmatpush1.msra.mxu0 0.0
  %157 = vmatprep.subr.mxu0 0.0
  %158 = vmatpush1.msra.mxu0 0.0
  %159 = vmatprep.subr.mxu0 0.0
  %160 = vmatpush1.msra.mxu0 0.0
  %161 = vmatprep.subr.mxu0 0.0
  %162 = vmatpush1.msra.mxu0 0.0
  %163 = vmatprep.subr.mxu0 0.0
  %164 = vmatpush1.msra.mxu0 0.0
  %165 = vmatprep.subr.mxu0 0.0
  %166 = vmatpush1.msra.mxu0 0.0
  %167 = vmatprep.subr.mxu0 0.0
  %168 = vmatpush1.msra.mxu0 0.0
  %169 = vmatprep.subr.mxu0 0.0
  %170 = vmatpush1.msra.mxu0 0.0
  %171 = vmatprep.subr.mxu0 0.0
  %172 = vmatpush1.msra.mxu0 0.0
  %173 = vmatprep.subr.mxu0 0.0
  %174 = vmatpush1.msra.mxu0 0.0
  %175 = vmatprep.subr.mxu0 0.0
  %176 = vmatpush1.msra.mxu0 0.0
  %177 = vmatprep.subr.mxu0 0.0
  %178 = vmatpush1.msra.mxu0 0.0
  %179 = vmatprep.subr.mxu0 0.0
  %180 = vmatpush1.msra.mxu0 0.0
  %181 = vmatprep.subr.mxu0 0.0
  %182 = vmatpush1.msra.mxu0 0.0
  %183 = vmatprep.subr.mxu0 0.0
  %184 = vmatpush1.msra.mxu0 %v144
  %185 = vmatprep.subr.mxu0 0.0
  %186 = vmatpush2.msra.mxu0 0.0
  %187 = vmatprep.subr.mxu0 0.0
  %188 = vmatpush2.msra.mxu0 0.0
  %189 = vmatprep.subr.mxu0 0.0
  %190 = vmatpush2.msra.mxu0 0.0
  %191 = vmatprep.subr.mxu0 0.0
  %192 = vmatpush2.msra.mxu0 0.0
  %193 = vmatprep.subr.mxu0 0.0
  %194 = vmatpush2.msra.mxu0 0.0
  %195 = vmatprep.subr.mxu0 0.0
  %196 = vmatpush2.msra.mxu0 0.0
  %197 = vmatprep.subr.mxu0 0.0
  %198 = vmatpush2.msra.mxu0 0.0
  %199 = vmatprep.subr.mxu0 0.0
  %200 = vmatpush2.msra.mxu0 0.0
  %201 = vmatprep.subr.mxu0 0.0
  %202 = vmatpush2.msra.mxu0 0.0
  %203 = vmatprep.subr.mxu0 0.0
  %204 = vmatpush2.msra.mxu0 0.0
  %205 = vmatprep.subr.mxu0 0.0
  %206 = vmatpush2.msra.mxu0 0.0
  %207 = vmatprep.subr.mxu0 0.0
  %208 = vmatpush2.msra.mxu0 0.0
  %209 = vmatprep.subr.mxu0 0.0
  %210 = vmatpush2.msra.mxu0 0.0
  %211 = vmatprep.subr.mxu0 0.0
  %212 = vmatpush2.msra.mxu0 0.0
  %213 = vmatprep.subr.mxu0 0.0
  %214 = vmatpush2.msra.mxu0 0.0
  %215 = vmatprep.subr.mxu0 0.0
  %216 = vmatpush2.msra.mxu0 0.0
  %217 = vmatprep.mubr.f32.mxu0 0.0
  %218 = vmatmul.mubr.f32.gmra.mxu0 %v151
  %v219 = vpop.f32.mrf.mxu0
  %v220 = vadd.f32 %v148, %v219
  %v221 = vpop.f32.mrf.mxu0
  %222 = vdwg.mxu0
  %v223 = vxor.u32 %v220, 2147483648
  %v224 = vmul.f32 %v223, 1.442695
  %v225 = vpow.pop %v224
  %v226 = vadd.f32 %v225, 1.0
  %v227 = vrcp.pop %v226
  %v228 = vmul.f32 1.0, %v227
  %v229 = vlaneseq
  %v230 = vshrl.u32 %v229, 7
  %v231 = vsub.s32 0, %v230
  %v232 = vrot.slane %v35, %v231
  %v233 = vmul.f32 %v228, %v232
  %234 = vadd.xlane.f32.xlu0 %v233
  %v235 = vpop.xlane.xlu0 %234
  %v236 = vadd.f32 %v235, 0.0
  %v238 = vlaneseq
  %v239 = vand.u32 %v238, 127
  %v240 = vlaneseq
  %v241 = vshrl.u32 %v240, 7
  %v242 = vsub.s32 %v239, %v241
  %v243 = vrot.slane %v236, %v242
  %vm245 = vcmask 24576
  %246 = vst.msk [vmem:[%s8] sm:$0x1] %vm245, %v243
  %v247 = vld [vmem:[%s1 + $0x1] sm:$0x1]
  %s248 = sadd.s32 0, 2
  %s249 = scalar_lea.vmem %s0, %s248
  %v250 = vld [vmem:[%s249] sm:$0x1]
  %v251 = vlaneseq
  %v252 = vshrl.u32 %v251, 7
  %v253 = vsub.s32 0, %v252
  %v254 = vrot.slane %v250, %v253
  %v255 = vmul.f32 %v40, %v254
  %v256 = vadd.f32 %v50, %v255
  %v257 = vld [vmem:[%s249 + $0x1] sm:$0x1]
  %v258 = vlaneseq
  %v259 = vshrl.u32 %v258, 7
  %v260 = vsub.s32 0, %v259
  %v261 = vrot.slane %v257, %v260
  %v262 = vmul.f32 %v56, %v261
  %v263 = vadd.f32 %v256, %v262
  %v264 = vmax.f32 %v263, 0.0
  %265 = vmatprep.subr.mxu0 0.0
  %266 = vmatpush1.msra.mxu0 0.0
  %267 = vmatprep.subr.mxu0 0.0
  %268 = vmatpush1.msra.mxu0 0.0
  %269 = vmatprep.subr.mxu0 0.0
  %270 = vmatpush1.msra.mxu0 0.0
  %271 = vmatprep.subr.mxu0 0.0
  %272 = vmatpush1.msra.mxu0 0.0
  %273 = vmatprep.subr.mxu0 0.0
  %274 = vmatpush1.msra.mxu0 0.0
  %275 = vmatprep.subr.mxu0 0.0
  %276 = vmatpush1.msra.mxu0 0.0
  %277 = vmatprep.subr.mxu0 0.0
  %278 = vmatpush1.msra.mxu0 0.0
  %279 = vmatprep.subr.mxu0 0.0
  %280 = vmatpush1.msra.mxu0 0.0
  %281 = vmatprep.subr.mxu0 0.0
  %282 = vmatpush1.msra.mxu0 0.0
  %283 = vmatprep.subr.mxu0 0.0
  %284 = vmatpush1.msra.mxu0 0.0
  %285 = vmatprep.subr.mxu0 0.0
  %286 = vmatpush1.msra.mxu0 0.0
  %287 = vmatprep.subr.mxu0 0.0
  %288 = vmatpush1.msra.mxu0 0.0
  %289 = vmatprep.subr.mxu0 0.0
  %290 = vmatpush1.msra.mxu0 0.0
  %291 = vmatprep.subr.mxu0 0.0
  %292 = vmatpush1.msra.mxu0 0.0
  %293 = vmatprep.subr.mxu0 0.0
  %294 = vmatpush1.msra.mxu0 0.0
  %295 = vmatprep.subr.mxu0 0.0
  %296 = vmatpush1.msra.mxu0 %v264
  %297 = vmatprep.subr.mxu0 0.0
  %298 = vmatpush2.msra.mxu0 0.0
  %299 = vmatprep.subr.mxu0 0.0
  %300 = vmatpush2.msra.mxu0 0.0
  %301 = vmatprep.subr.mxu0 0.0
  %302 = vmatpush2.msra.mxu0 0.0
  %303 = vmatprep.subr.mxu0 0.0
  %304 = vmatpush2.msra.mxu0 0.0
  %305 = vmatprep.subr.mxu0 0.0
  %306 = vmatpush2.msra.mxu0 0.0
  %307 = vmatprep.subr.mxu0 0.0
  %308 = vmatpush2.msra.mxu0 0.0
  %309 = vmatprep.subr.mxu0 0.0
  %310 = vmatpush2.msra.mxu0 0.0
  %311 = vmatprep.subr.mxu0 0.0
  %312 = vmatpush2.msra.mxu0 0.0
  %313 = vmatprep.subr.mxu0 0.0
  %314 = vmatpush2.msra.mxu0 0.0
  %315 = vmatprep.subr.mxu0 0.0
  %316 = vmatpush2.msra.mxu0 0.0
  %317 = vmatprep.subr.mxu0 0.0
  %318 = vmatpush2.msra.mxu0 0.0
  %319 = vmatprep.subr.mxu0 0.0
  %320 = vmatpush2.msra.mxu0 0.0
  %321 = vmatprep.subr.mxu0 0.0
  %322 = vmatpush2.msra.mxu0 0.0
  %323 = vmatprep.subr.mxu0 0.0
  %324 = vmatpush2.msra.mxu0 0.0
  %325 = vmatprep.subr.mxu0 0.0
  %326 = vmatpush2.msra.mxu0 0.0
  %327 = vmatprep.subr.mxu0 0.0
  %328 = vmatpush2.msra.mxu0 0.0
  %329 = vmatprep.mubr.f32.mxu0 0.0
  %330 = vmatmul.mubr.f32.gmra.mxu0 %v72
  %v331 = vpop.f32.mrf.mxu0
  %v332 = vadd.f32 %v68, %v331
  %v333 = vpop.f32.mrf.mxu0
  %334 = vdwg.mxu0
  %v335 = vmax.f32 %v332, 0.0
  %336 = vmatprep.subr.mxu0 0.0
  %337 = vmatpush1.msra.mxu0 0.0
  %338 = vmatprep.subr.mxu0 0.0
  %339 = vmatpush1.msra.mxu0 0.0
  %340 = vmatprep.subr.mxu0 0.0
  %341 = vmatpush1.msra.mxu0 0.0
  %342 = vmatprep.subr.mxu0 0.0
  %343 = vmatpush1.msra.mxu0 0.0
  %344 = vmatprep.subr.mxu0 0.0
  %345 = vmatpush1.msra.mxu0 0.0
  %346 = vmatprep.subr.mxu0 0.0
  %347 = vmatpush1.msra.mxu0 0.0
  %348 = vmatprep.subr.mxu0 0.0
  %349 = vmatpush1.msra.mxu0 0.0
  %350 = vmatprep.subr.mxu0 0.0
  %351 = vmatpush1.msra.mxu0 0.0
  %352 = vmatprep.subr.mxu0 0.0
  %353 = vmatpush1.msra.mxu0 0.0
  %354 = vmatprep.subr.mxu0 0.0
  %355 = vmatpush1.msra.mxu0 0.0
  %356 = vmatprep.subr.mxu0 0.0
  %357 = vmatpush1.msra.mxu0 0.0
  %358 = vmatprep.subr.mxu0 0.0
  %359 = vmatpush1.msra.mxu0 0.0
  %360 = vmatprep.subr.mxu0 0.0
  %361 = vmatpush1.msra.mxu0 0.0
  %362 = vmatprep.subr.mxu0 0.0
  %363 = vmatpush1.msra.mxu0 0.0
  %364 = vmatprep.subr.mxu0 0.0
  %365 = vmatpush1.msra.mxu0 0.0
  %366 = vmatprep.subr.mxu0 0.0
  %367 = vmatpush1.msra.mxu0 %v335
  %368 = vmatprep.subr.mxu0 0.0
  %369 = vmatpush2.msra.mxu0 0.0
  %370 = vmatprep.subr.mxu0 0.0
  %371 = vmatpush2.msra.mxu0 0.0
  %372 = vmatprep.subr.mxu0 0.0
  %373 = vmatpush2.msra.mxu0 0.0
  %374 = vmatprep.subr.mxu0 0.0
  %375 = vmatpush2.msra.mxu0 0.0
  %376 = vmatprep.subr.mxu0 0.0
  %377 = vmatpush2.msra.mxu0 0.0
  %378 = vmatprep.subr.mxu0 0.0
  %379 = vmatpush2.msra.mxu0 0.0
  %380 = vmatprep.subr.mxu0 0.0
  %381 = vmatpush2.msra.mxu0 0.0
  %382 = vmatprep.subr.mxu0 0.0
  %383 = vmatpush2.msra.mxu0 0.0
  %384 = vmatprep.subr.mxu0 0.0
  %385 = vmatpush2.msra.mxu0 0.0
  %386 = vmatprep.subr.mxu0 0.0
  %387 = vmatpush2.msra.mxu0 0.0
  %388 = vmatprep.subr.mxu0 0.0
  %389 = vmatpush2.msra.mxu0 0.0
  %390 = vmatprep.subr.mxu0 0.0
  %391 = vmatpush2.msra.mxu0 0.0
  %392 = vmatprep.subr.mxu0 0.0
  %393 = vmatpush2.msra.mxu0 0.0
  %394 = vmatprep.subr.mxu0 0.0
  %395 = vmatpush2.msra.mxu0 0.0
  %396 = vmatprep.subr.mxu0 0.0
  %397 = vmatpush2.msra.mxu0 0.0
  %398 = vmatprep.subr.mxu0 0.0
  %399 = vmatpush2.msra.mxu0 0.0
  %400 = vmatprep.mubr.f32.mxu0 0.0
  %401 = vmatmul.mubr.f32.gmra.mxu0 %v151
  %v402 = vpop.f32.mrf.mxu0
  %v403 = vadd.f32 %v148, %v402
  %v404 = vpop.f32.mrf.mxu0
  %405 = vdwg.mxu0
  %v406 = vxor.u32 %v403, 2147483648
  %v407 = vmul.f32 %v406, 1.442695
  %v408 = vpow.pop %v407
  %v409 = vadd.f32 %v408, 1.0
  %v410 = vrcp.pop %v409
  %v411 = vmul.f32 1.0, %v410
  %v412 = vlaneseq
  %v413 = vshrl.u32 %v412, 7
  %v414 = vsub.s32 0, %v413
  %v415 = vrot.slane %v247, %v414
  %v416 = vmul.f32 %v411, %v415
  %417 = vadd.xlane.f32.xlu0 %v416
  %v418 = vpop.xlane.xlu0 %417
  %v419 = vadd.f32 %v418, 0.0
  %v421 = vlaneseq
  %v422 = vshrl.u32 %v421, 7
  %v423 = vsub.s32 %v239, %v422
  %v424 = vrot.slane %v419, %v423
  %426 = vst.msk [vmem:[%s8 + $0x1] sm:$0x1] %vm245, %v424
  %v427 = vld [vmem:[%s1 + $0x2] sm:$0x1]
  %s428 = sadd.s32 0, 4
  %s429 = scalar_lea.vmem %s0, %s428
  %v430 = vld [vmem:[%s429] sm:$0x1]
  %v431 = vlaneseq
  %v432 = vshrl.u32 %v431, 7
  %v433 = vsub.s32 0, %v432
  %v434 = vrot.slane %v430, %v433
  %v435 = vmul.f32 %v40, %v434
  %v436 = vadd.f32 %v50, %v435
  %v437 = vld [vmem:[%s429 + $0x1] sm:$0x1]
  %v438 = vlaneseq
  %v439 = vshrl.u32 %v438, 7
  %v440 = vsub.s32 0, %v439
  %v441 = vrot.slane %v437, %v440
  %v442 = vmul.f32 %v56, %v441
  %v443 = vadd.f32 %v436, %v442
  %v444 = vmax.f32 %v443, 0.0
  %445 = vmatprep.subr.mxu0 0.0
  %446 = vmatpush1.msra.mxu0 0.0
  %447 = vmatprep.subr.mxu0 0.0
  %448 = vmatpush1.msra.mxu0 0.0
  %449 = vmatprep.subr.mxu0 0.0
  %450 = vmatpush1.msra.mxu0 0.0
  %451 = vmatprep.subr.mxu0 0.0
  %452 = vmatpush1.msra.mxu0 0.0
  %453 = vmatprep.subr.mxu0 0.0
  %454 = vmatpush1.msra.mxu0 0.0
  %455 = vmatprep.subr.mxu0 0.0
  %456 = vmatpush1.msra.mxu0 0.0
  %457 = vmatprep.subr.mxu0 0.0
  %458 = vmatpush1.msra.mxu0 0.0
  %459 = vmatprep.subr.mxu0 0.0
  %460 = vmatpush1.msra.mxu0 0.0
  %461 = vmatprep.subr.mxu0 0.0
  %462 = vmatpush1.msra.mxu0 0.0
  %463 = vmatprep.subr.mxu0 0.0
  %464 = vmatpush1.msra.mxu0 0.0
  %465 = vmatprep.subr.mxu0 0.0
  %466 = vmatpush1.msra.mxu0 0.0
  %467 = vmatprep.subr.mxu0 0.0
  %468 = vmatpush1.msra.mxu0 0.0
  %469 = vmatprep.subr.mxu0 0.0
  %470 = vmatpush1.msra.mxu0 0.0
  %471 = vmatprep.subr.mxu0 0.0
  %472 = vmatpush1.msra.mxu0 0.0
  %473 = vmatprep.subr.mxu0 0.0
  %474 = vmatpush1.msra.mxu0 0.0
  %475 = vmatprep.subr.mxu0 0.0
  %476 = vmatpush1.msra.mxu0 %v444
  %477 = vmatprep.subr.mxu0 0.0
  %478 = vmatpush2.msra.mxu0 0.0
  %479 = vmatprep.subr.mxu0 0.0
  %480 = vmatpush2.msra.mxu0 0.0
  %481 = vmatprep.subr.mxu0 0.0
  %482 = vmatpush2.msra.mxu0 0.0
  %483 = vmatprep.subr.mxu0 0.0
  %484 = vmatpush2.msra.mxu0 0.0
  %485 = vmatprep.subr.mxu0 0.0
  %486 = vmatpush2.msra.mxu0 0.0
  %487 = vmatprep.subr.mxu0 0.0
  %488 = vmatpush2.msra.mxu0 0.0
  %489 = vmatprep.subr.mxu0 0.0
  %490 = vmatpush2.msra.mxu0 0.0
  %491 = vmatprep.subr.mxu0 0.0
  %492 = vmatpush2.msra.mxu0 0.0
  %493 = vmatprep.subr.mxu0 0.0
  %494 = vmatpush2.msra.mxu0 0.0
  %495 = vmatprep.subr.mxu0 0.0
  %496 = vmatpush2.msra.mxu0 0.0
  %497 = vmatprep.subr.mxu0 0.0
  %498 = vmatpush2.msra.mxu0 0.0
  %499 = vmatprep.subr.mxu0 0.0
  %500 = vmatpush2.msra.mxu0 0.0
  %501 = vmatprep.subr.mxu0 0.0
  %502 = vmatpush2.msra.mxu0 0.0
  %503 = vmatprep.subr.mxu0 0.0
  %504 = vmatpush2.msra.mxu0 0.0
  %505 = vmatprep.subr.mxu0 0.0
  %506 = vmatpush2.msra.mxu0 0.0
  %507 = vmatprep.subr.mxu0 0.0
  %508 = vmatpush2.msra.mxu0 0.0
  %509 = vmatprep.mubr.f32.mxu0 0.0
  %510 = vmatmul.mubr.f32.gmra.mxu0 %v72
  %v511 = vpop.f32.mrf.mxu0
  %v512 = vadd.f32 %v68, %v511
  %v513 = vpop.f32.mrf.mxu0
  %514 = vdwg.mxu0
  %v515 = vmax.f32 %v512, 0.0
  %516 = vmatprep.subr.mxu0 0.0
  %517 = vmatpush1.msra.mxu0 0.0
  %518 = vmatprep.subr.mxu0 0.0
  %519 = vmatpush1.msra.mxu0 0.0
  %520 = vmatprep.subr.mxu0 0.0
  %521 = vmatpush1.msra.mxu0 0.0
  %522 = vmatprep.subr.mxu0 0.0
  %523 = vmatpush1.msra.mxu0 0.0
  %524 = vmatprep.subr.mxu0 0.0
  %525 = vmatpush1.msra.mxu0 0.0
  %526 = vmatprep.subr.mxu0 0.0
  %527 = vmatpush1.msra.mxu0 0.0
  %528 = vmatprep.subr.mxu0 0.0
  %529 = vmatpush1.msra.mxu0 0.0
  %530 = vmatprep.subr.mxu0 0.0
  %531 = vmatpush1.msra.mxu0 0.0
  %532 = vmatprep.subr.mxu0 0.0
  %533 = vmatpush1.msra.mxu0 0.0
  %534 = vmatprep.subr.mxu0 0.0
  %535 = vmatpush1.msra.mxu0 0.0
  %536 = vmatprep.subr.mxu0 0.0
  %537 = vmatpush1.msra.mxu0 0.0
  %538 = vmatprep.subr.mxu0 0.0
  %539 = vmatpush1.msra.mxu0 0.0
  %540 = vmatprep.subr.mxu0 0.0
  %541 = vmatpush1.msra.mxu0 0.0
  %542 = vmatprep.subr.mxu0 0.0
  %543 = vmatpush1.msra.mxu0 0.0
  %544 = vmatprep.subr.mxu0 0.0
  %545 = vmatpush1.msra.mxu0 0.0
  %546 = vmatprep.subr.mxu0 0.0
  %547 = vmatpush1.msra.mxu0 %v515
  %548 = vmatprep.subr.mxu0 0.0
  %549 = vmatpush2.msra.mxu0 0.0
  %550 = vmatprep.subr.mxu0 0.0
  %551 = vmatpush2.msra.mxu0 0.0
  %552 = vmatprep.subr.mxu0 0.0
  %553 = vmatpush2.msra.mxu0 0.0
  %554 = vmatprep.subr.mxu0 0.0
  %555 = vmatpush2.msra.mxu0 0.0
  %556 = vmatprep.subr.mxu0 0.0
  %557 = vmatpush2.msra.mxu0 0.0
  %558 = vmatprep.subr.mxu0 0.0
  %559 = vmatpush2.msra.mxu0 0.0
  %560 = vmatprep.subr.mxu0 0.0
  %561 = vmatpush2.msra.mxu0 0.0
  %562 = vmatprep.subr.mxu0 0.0
  %563 = vmatpush2.msra.mxu0 0.0
  %564 = vmatprep.subr.mxu0 0.0
  %565 = vmatpush2.msra.mxu0 0.0
  %566 = vmatprep.subr.mxu0 0.0
  %567 = vmatpush2.msra.mxu0 0.0
  %568 = vmatprep.subr.mxu0 0.0
  %569 = vmatpush2.msra.mxu0 0.0
  %570 = vmatprep.subr.mxu0 0.0
  %571 = vmatpush2.msra.mxu0 0.0
  %572 = vmatprep.subr.mxu0 0.0
  %573 = vmatpush2.msra.mxu0 0.0
  %574 = vmatprep.subr.mxu0 0.0
  %575 = vmatpush2.msra.mxu0 0.0
  %576 = vmatprep.subr.mxu0 0.0
  %577 = vmatpush2.msra.mxu0 0.0
  %578 = vmatprep.subr.mxu0 0.0
  %579 = vmatpush2.msra.mxu0 0.0
  %580 = vmatprep.mubr.f32.mxu0 0.0
  %581 = vmatmul.mubr.f32.gmra.mxu0 %v151
  %v582 = vpop.f32.mrf.mxu0
  %v583 = vadd.f32 %v148, %v582
  %v584 = vpop.f32.mrf.mxu0
  %585 = vdwg.mxu0
  %v586 = vxor.u32 %v583, 2147483648
  %v587 = vmul.f32 %v586, 1.442695
  %v588 = vpow.pop %v587
  %v589 = vadd.f32 %v588, 1.0
  %v590 = vrcp.pop %v589
  %v591 = vmul.f32 1.0, %v590
  %v592 = vlaneseq
  %v593 = vshrl.u32 %v592, 7
  %v594 = vsub.s32 0, %v593
  %v595 = vrot.slane %v427, %v594
  %v596 = vmul.f32 %v591, %v595
  %597 = vadd.xlane.f32.xlu0 %v596
  %v598 = vpop.xlane.xlu0 %597
  %v599 = vadd.f32 %v598, 0.0
  %v601 = vlaneseq
  %v602 = vshrl.u32 %v601, 7
  %v603 = vsub.s32 %v239, %v602
  %v604 = vrot.slane %v599, %v603
  %606 = vst.msk [vmem:[%s8 + $0x2] sm:$0x1] %vm245, %v604
  %v607 = vld [vmem:[%s1 + $0x3] sm:$0x1]
  %s608 = sadd.s32 0, 6
  %s609 = scalar_lea.vmem %s0, %s608
  %v610 = vld [vmem:[%s609] sm:$0x1]
  %v611 = vlaneseq
  %v612 = vshrl.u32 %v611, 7
  %v613 = vsub.s32 0, %v612
  %v614 = vrot.slane %v610, %v613
  %v615 = vmul.f32 %v40, %v614
  %v616 = vadd.f32 %v50, %v615
  %v617 = vld [vmem:[%s609 + $0x1] sm:$0x1]
  %v618 = vlaneseq
  %v619 = vshrl.u32 %v618, 7
  %v620 = vsub.s32 0, %v619
  %v621 = vrot.slane %v617, %v620
  %v622 = vmul.f32 %v56, %v621
  %v623 = vadd.f32 %v616, %v622
  %v624 = vmax.f32 %v623, 0.0
  %625 = vmatprep.subr.mxu0 0.0
  %626 = vmatpush1.msra.mxu0 0.0
  %627 = vmatprep.subr.mxu0 0.0
  %628 = vmatpush1.msra.mxu0 0.0
  %629 = vmatprep.subr.mxu0 0.0
  %630 = vmatpush1.msra.mxu0 0.0
  %631 = vmatprep.subr.mxu0 0.0
  %632 = vmatpush1.msra.mxu0 0.0
  %633 = vmatprep.subr.mxu0 0.0
  %634 = vmatpush1.msra.mxu0 0.0
  %635 = vmatprep.subr.mxu0 0.0
  %636 = vmatpush1.msra.mxu0 0.0
  %637 = vmatprep.subr.mxu0 0.0
  %638 = vmatpush1.msra.mxu0 0.0
  %639 = vmatprep.subr.mxu0 0.0
  %640 = vmatpush1.msra.mxu0 0.0
  %641 = vmatprep.subr.mxu0 0.0
  %642 = vmatpush1.msra.mxu0 0.0
  %643 = vmatprep.subr.mxu0 0.0
  %644 = vmatpush1.msra.mxu0 0.0
  %645 = vmatprep.subr.mxu0 0.0
  %646 = vmatpush1.msra.mxu0 0.0
  %647 = vmatprep.subr.mxu0 0.0
  %648 = vmatpush1.msra.mxu0 0.0
  %649 = vmatprep.subr.mxu0 0.0
  %650 = vmatpush1.msra.mxu0 0.0
  %651 = vmatprep.subr.mxu0 0.0
  %652 = vmatpush1.msra.mxu0 0.0
  %653 = vmatprep.subr.mxu0 0.0
  %654 = vmatpush1.msra.mxu0 0.0
  %655 = vmatprep.subr.mxu0 0.0
  %656 = vmatpush1.msra.mxu0 %v624
  %657 = vmatprep.subr.mxu0 0.0
  %658 = vmatpush2.msra.mxu0 0.0
  %659 = vmatprep.subr.mxu0 0.0
  %660 = vmatpush2.msra.mxu0 0.0
  %661 = vmatprep.subr.mxu0 0.0
  %662 = vmatpush2.msra.mxu0 0.0
  %663 = vmatprep.subr.mxu0 0.0
  %664 = vmatpush2.msra.mxu0 0.0
  %665 = vmatprep.subr.mxu0 0.0
  %666 = vmatpush2.msra.mxu0 0.0
  %667 = vmatprep.subr.mxu0 0.0
  %668 = vmatpush2.msra.mxu0 0.0
  %669 = vmatprep.subr.mxu0 0.0
  %670 = vmatpush2.msra.mxu0 0.0
  %671 = vmatprep.subr.mxu0 0.0
  %672 = vmatpush2.msra.mxu0 0.0
  %673 = vmatprep.subr.mxu0 0.0
  %674 = vmatpush2.msra.mxu0 0.0
  %675 = vmatprep.subr.mxu0 0.0
  %676 = vmatpush2.msra.mxu0 0.0
  %677 = vmatprep.subr.mxu0 0.0
  %678 = vmatpush2.msra.mxu0 0.0
  %679 = vmatprep.subr.mxu0 0.0
  %680 = vmatpush2.msra.mxu0 0.0
  %681 = vmatprep.subr.mxu0 0.0
  %682 = vmatpush2.msra.mxu0 0.0
  %683 = vmatprep.subr.mxu0 0.0
  %684 = vmatpush2.msra.mxu0 0.0
  %685 = vmatprep.subr.mxu0 0.0
  %686 = vmatpush2.msra.mxu0 0.0
  %687 = vmatprep.subr.mxu0 0.0
  %688 = vmatpush2.msra.mxu0 0.0
  %689 = vmatprep.mubr.f32.mxu0 0.0
  %690 = vmatmul.mubr.f32.gmra.mxu0 %v72
  %v691 = vpop.f32.mrf.mxu0
  %v692 = vadd.f32 %v68, %v691
  %v693 = vpop.f32.mrf.mxu0
  %694 = vdwg.mxu0
  %v695 = vmax.f32 %v692, 0.0
  %696 = vmatprep.subr.mxu0 0.0
  %697 = vmatpush1.msra.mxu0 0.0
  %698 = vmatprep.subr.mxu0 0.0
  %699 = vmatpush1.msra.mxu0 0.0
  %700 = vmatprep.subr.mxu0 0.0
  %701 = vmatpush1.msra.mxu0 0.0
  %702 = vmatprep.subr.mxu0 0.0
  %703 = vmatpush1.msra.mxu0 0.0
  %704 = vmatprep.subr.mxu0 0.0
  %705 = vmatpush1.msra.mxu0 0.0
  %706 = vmatprep.subr.mxu0 0.0
  %707 = vmatpush1.msra.mxu0 0.0
  %708 = vmatprep.subr.mxu0 0.0
  %709 = vmatpush1.msra.mxu0 0.0
  %710 = vmatprep.subr.mxu0 0.0
  %711 = vmatpush1.msra.mxu0 0.0
  %712 = vmatprep.subr.mxu0 0.0
  %713 = vmatpush1.msra.mxu0 0.0
  %714 = vmatprep.subr.mxu0 0.0
  %715 = vmatpush1.msra.mxu0 0.0
  %716 = vmatprep.subr.mxu0 0.0
  %717 = vmatpush1.msra.mxu0 0.0
  %718 = vmatprep.subr.mxu0 0.0
  %719 = vmatpush1.msra.mxu0 0.0
  %720 = vmatprep.subr.mxu0 0.0
  %721 = vmatpush1.msra.mxu0 0.0
  %722 = vmatprep.subr.mxu0 0.0
  %723 = vmatpush1.msra.mxu0 0.0
  %724 = vmatprep.subr.mxu0 0.0
  %725 = vmatpush1.msra.mxu0 0.0
  %726 = vmatprep.subr.mxu0 0.0
  %727 = vmatpush1.msra.mxu0 %v695
  %728 = vmatprep.subr.mxu0 0.0
  %729 = vmatpush2.msra.mxu0 0.0
  %730 = vmatprep.subr.mxu0 0.0
  %731 = vmatpush2.msra.mxu0 0.0
  %732 = vmatprep.subr.mxu0 0.0
  %733 = vmatpush2.msra.mxu0 0.0
  %734 = vmatprep.subr.mxu0 0.0
  %735 = vmatpush2.msra.mxu0 0.0
  %736 = vmatprep.subr.mxu0 0.0
  %737 = vmatpush2.msra.mxu0 0.0
  %738 = vmatprep.subr.mxu0 0.0
  %739 = vmatpush2.msra.mxu0 0.0
  %740 = vmatprep.subr.mxu0 0.0
  %741 = vmatpush2.msra.mxu0 0.0
  %742 = vmatprep.subr.mxu0 0.0
  %743 = vmatpush2.msra.mxu0 0.0
  %744 = vmatprep.subr.mxu0 0.0
  %745 = vmatpush2.msra.mxu0 0.0
  %746 = vmatprep.subr.mxu0 0.0
  %747 = vmatpush2.msra.mxu0 0.0
  %748 = vmatprep.subr.mxu0 0.0
  %749 = vmatpush2.msra.mxu0 0.0
  %750 = vmatprep.subr.mxu0 0.0
  %751 = vmatpush2.msra.mxu0 0.0
  %752 = vmatprep.subr.mxu0 0.0
  %753 = vmatpush2.msra.mxu0 0.0
  %754 = vmatprep.subr.mxu0 0.0
  %755 = vmatpush2.msra.mxu0 0.0
  %756 = vmatprep.subr.mxu0 0.0
  %757 = vmatpush2.msra.mxu0 0.0
  %758 = vmatprep.subr.mxu0 0.0
  %759 = vmatpush2.msra.mxu0 0.0
  %760 = vmatprep.mubr.f32.mxu0 0.0
  %761 = vmatmul.mubr.f32.gmra.mxu0 %v151
  %v762 = vpop.f32.mrf.mxu0
  %v763 = vadd.f32 %v148, %v762
  %v764 = vpop.f32.mrf.mxu0
  %765 = vdwg.mxu0
  %v766 = vxor.u32 %v763, 2147483648
  %v767 = vmul.f32 %v766, 1.442695
  %v768 = vpow.pop %v767
  %v769 = vadd.f32 %v768, 1.0
  %v770 = vrcp.pop %v769
  %v771 = vmul.f32 1.0, %v770
  %v772 = vlaneseq
  %v773 = vshrl.u32 %v772, 7
  %v774 = vsub.s32 0, %v773
  %v775 = vrot.slane %v607, %v774
  %v776 = vmul.f32 %v771, %v775
  %777 = vadd.xlane.f32.xlu0 %v776
  %v778 = vpop.xlane.xlu0 %777
  %v779 = vadd.f32 %v778, 0.0
  %v781 = vlaneseq
  %v782 = vshrl.u32 %v781, 7
  %v783 = vsub.s32 %v239, %v782
  %v784 = vrot.slane %v779, %v783
  %786 = vst.msk [vmem:[%s8 + $0x3] sm:$0x1] %vm245, %v784
  %v787 = vld [vmem:[%s1 + $0x4] sm:$0x1]
  %s788 = sadd.s32 0, 8
  %s789 = scalar_lea.vmem %s0, %s788
  %v790 = vld [vmem:[%s789] sm:$0x1]
  %v791 = vlaneseq
  %v792 = vshrl.u32 %v791, 7
  %v793 = vsub.s32 0, %v792
  %v794 = vrot.slane %v790, %v793
  %v795 = vmul.f32 %v40, %v794
  %v796 = vadd.f32 %v50, %v795
  %v797 = vld [vmem:[%s789 + $0x1] sm:$0x1]
  %v798 = vlaneseq
  %v799 = vshrl.u32 %v798, 7
  %v800 = vsub.s32 0, %v799
  %v801 = vrot.slane %v797, %v800
  %v802 = vmul.f32 %v56, %v801
  %v803 = vadd.f32 %v796, %v802
  %v804 = vmax.f32 %v803, 0.0
  %805 = vmatprep.subr.mxu0 0.0
  %806 = vmatpush1.msra.mxu0 0.0
  %807 = vmatprep.subr.mxu0 0.0
  %808 = vmatpush1.msra.mxu0 0.0
  %809 = vmatprep.subr.mxu0 0.0
  %810 = vmatpush1.msra.mxu0 0.0
  %811 = vmatprep.subr.mxu0 0.0
  %812 = vmatpush1.msra.mxu0 0.0
  %813 = vmatprep.subr.mxu0 0.0
  %814 = vmatpush1.msra.mxu0 0.0
  %815 = vmatprep.subr.mxu0 0.0
  %816 = vmatpush1.msra.mxu0 0.0
  %817 = vmatprep.subr.mxu0 0.0
  %818 = vmatpush1.msra.mxu0 0.0
  %819 = vmatprep.subr.mxu0 0.0
  %820 = vmatpush1.msra.mxu0 0.0
  %821 = vmatprep.subr.mxu0 0.0
  %822 = vmatpush1.msra.mxu0 0.0
  %823 = vmatprep.subr.mxu0 0.0
  %824 = vmatpush1.msra.mxu0 0.0
  %825 = vmatprep.subr.mxu0 0.0
  %826 = vmatpush1.msra.mxu0 0.0
  %827 = vmatprep.subr.mxu0 0.0
  %828 = vmatpush1.msra.mxu0 0.0
  %829 = vmatprep.subr.mxu0 0.0
  %830 = vmatpush1.msra.mxu0 0.0
  %831 = vmatprep.subr.mxu0 0.0
  %832 = vmatpush1.msra.mxu0 0.0
  %833 = vmatprep.subr.mxu0 0.0
  %834 = vmatpush1.msra.mxu0 0.0
  %835 = vmatprep.subr.mxu0 0.0
  %836 = vmatpush1.msra.mxu0 %v804
  %837 = vmatprep.subr.mxu0 0.0
  %838 = vmatpush2.msra.mxu0 0.0
  %839 = vmatprep.subr.mxu0 0.0
  %840 = vmatpush2.msra.mxu0 0.0
  %841 = vmatprep.subr.mxu0 0.0
  %842 = vmatpush2.msra.mxu0 0.0
  %843 = vmatprep.subr.mxu0 0.0
  %844 = vmatpush2.msra.mxu0 0.0
  %845 = vmatprep.subr.mxu0 0.0
  %846 = vmatpush2.msra.mxu0 0.0
  %847 = vmatprep.subr.mxu0 0.0
  %848 = vmatpush2.msra.mxu0 0.0
  %849 = vmatprep.subr.mxu0 0.0
  %850 = vmatpush2.msra.mxu0 0.0
  %851 = vmatprep.subr.mxu0 0.0
  %852 = vmatpush2.msra.mxu0 0.0
  %853 = vmatprep.subr.mxu0 0.0
  %854 = vmatpush2.msra.mxu0 0.0
  %855 = vmatprep.subr.mxu0 0.0
  %856 = vmatpush2.msra.mxu0 0.0
  %857 = vmatprep.subr.mxu0 0.0
  %858 = vmatpush2.msra.mxu0 0.0
  %859 = vmatprep.subr.mxu0 0.0
  %860 = vmatpush2.msra.mxu0 0.0
  %861 = vmatprep.subr.mxu0 0.0
  %862 = vmatpush2.msra.mxu0 0.0
  %863 = vmatprep.subr.mxu0 0.0
  %864 = vmatpush2.msra.mxu0 0.0
  %865 = vmatprep.subr.mxu0 0.0
  %866 = vmatpush2.msra.mxu0 0.0
  %867 = vmatprep.subr.mxu0 0.0
  %868 = vmatpush2.msra.mxu0 0.0
  %869 = vmatprep.mubr.f32.mxu0 0.0
  %870 = vmatmul.mubr.f32.gmra.mxu0 %v72
  %v871 = vpop.f32.mrf.mxu0
  %v872 = vadd.f32 %v68, %v871
  %v873 = vpop.f32.mrf.mxu0
  %874 = vdwg.mxu0
  %v875 = vmax.f32 %v872, 0.0
  %876 = vmatprep.subr.mxu0 0.0
  %877 = vmatpush1.msra.mxu0 0.0
  %878 = vmatprep.subr.mxu0 0.0
  %879 = vmatpush1.msra.mxu0 0.0
  %880 = vmatprep.subr.mxu0 0.0
  %881 = vmatpush1.msra.mxu0 0.0
  %882 = vmatprep.subr.mxu0 0.0
  %883 = vmatpush1.msra.mxu0 0.0
  %884 = vmatprep.subr.mxu0 0.0
  %885 = vmatpush1.msra.mxu0 0.0
  %886 = vmatprep.subr.mxu0 0.0
  %887 = vmatpush1.msra.mxu0 0.0
  %888 = vmatprep.subr.mxu0 0.0
  %889 = vmatpush1.msra.mxu0 0.0
  %890 = vmatprep.subr.mxu0 0.0
  %891 = vmatpush1.msra.mxu0 0.0
  %892 = vmatprep.subr.mxu0 0.0
  %893 = vmatpush1.msra.mxu0 0.0
  %894 = vmatprep.subr.mxu0 0.0
  %895 = vmatpush1.msra.mxu0 0.0
  %896 = vmatprep.subr.mxu0 0.0
  %897 = vmatpush1.msra.mxu0 0.0
  %898 = vmatprep.subr.mxu0 0.0
  %899 = vmatpush1.msra.mxu0 0.0
  %900 = vmatprep.subr.mxu0 0.0
  %901 = vmatpush1.msra.mxu0 0.0
  %902 = vmatprep.subr.mxu0 0.0
  %903 = vmatpush1.msra.mxu0 0.0
  %904 = vmatprep.subr.mxu0 0.0
  %905 = vmatpush1.msra.mxu0 0.0
  %906 = vmatprep.subr.mxu0 0.0
  %907 = vmatpush1.msra.mxu0 %v875
  %908 = vmatprep.subr.mxu0 0.0
  %909 = vmatpush2.msra.mxu0 0.0
  %910 = vmatprep.subr.mxu0 0.0
  %911 = vmatpush2.msra.mxu0 0.0
  %912 = vmatprep.subr.mxu0 0.0
  %913 = vmatpush2.msra.mxu0 0.0
  %914 = vmatprep.subr.mxu0 0.0
  %915 = vmatpush2.msra.mxu0 0.0
  %916 = vmatprep.subr.mxu0 0.0
  %917 = vmatpush2.msra.mxu0 0.0
  %918 = vmatprep.subr.mxu0 0.0
  %919 = vmatpush2.msra.mxu0 0.0
  %920 = vmatprep.subr.mxu0 0.0
  %921 = vmatpush2.msra.mxu0 0.0
  %922 = vmatprep.subr.mxu0 0.0
  %923 = vmatpush2.msra.mxu0 0.0
  %924 = vmatprep.subr.mxu0 0.0
  %925 = vmatpush2.msra.mxu0 0.0
  %926 = vmatprep.subr.mxu0 0.0
  %927 = vmatpush2.msra.mxu0 0.0
  %928 = vmatprep.subr.mxu0 0.0
  %929 = vmatpush2.msra.mxu0 0.0
  %930 = vmatprep.subr.mxu0 0.0
  %931 = vmatpush2.msra.mxu0 0.0
  %932 = vmatprep.subr.mxu0 0.0
  %933 = vmatpush2.msra.mxu0 0.0
  %934 = vmatprep.subr.mxu0 0.0
  %935 = vmatpush2.msra.mxu0 0.0
  %936 = vmatprep.subr.mxu0 0.0
  %937 = vmatpush2.msra.mxu0 0.0
  %938 = vmatprep.subr.mxu0 0.0
  %939 = vmatpush2.msra.mxu0 0.0
  %940 = vmatprep.mubr.f32.mxu0 0.0
  %941 = vmatmul.mubr.f32.gmra.mxu0 %v151
  %v942 = vpop.f32.mrf.mxu0
  %v943 = vadd.f32 %v148, %v942
  %v944 = vpop.f32.mrf.mxu0
  %945 = vdwg.mxu0
  %v946 = vxor.u32 %v943, 2147483648
  %v947 = vmul.f32 %v946, 1.442695
  %v948 = vpow.pop %v947
  %v949 = vadd.f32 %v948, 1.0
  %v950 = vrcp.pop %v949
  %v951 = vmul.f32 1.0, %v950
  %v952 = vlaneseq
  %v953 = vshrl.u32 %v952, 7
  %v954 = vsub.s32 0, %v953
  %v955 = vrot.slane %v787, %v954
  %v956 = vmul.f32 %v951, %v955
  %957 = vadd.xlane.f32.xlu0 %v956
  %v958 = vpop.xlane.xlu0 %957
  %v959 = vadd.f32 %v958, 0.0
  %v961 = vlaneseq
  %v962 = vshrl.u32 %v961, 7
  %v963 = vsub.s32 %v239, %v962
  %v964 = vrot.slane %v959, %v963
  %966 = vst.msk [vmem:[%s8 + $0x4] sm:$0x1] %vm245, %v964
  %v967 = vld [vmem:[%s1 + $0x5] sm:$0x1]
  %s968 = sadd.s32 0, 10
  %s969 = scalar_lea.vmem %s0, %s968
  %v970 = vld [vmem:[%s969] sm:$0x1]
  %v971 = vlaneseq
  %v972 = vshrl.u32 %v971, 7
  %v973 = vsub.s32 0, %v972
  %v974 = vrot.slane %v970, %v973
  %v975 = vmul.f32 %v40, %v974
  %v976 = vadd.f32 %v50, %v975
  %v977 = vld [vmem:[%s969 + $0x1] sm:$0x1]
  %v978 = vlaneseq
  %v979 = vshrl.u32 %v978, 7
  %v980 = vsub.s32 0, %v979
  %v981 = vrot.slane %v977, %v980
  %v982 = vmul.f32 %v56, %v981
  %v983 = vadd.f32 %v976, %v982
  %v984 = vmax.f32 %v983, 0.0
  %985 = vmatprep.subr.mxu0 0.0
  %986 = vmatpush1.msra.mxu0 0.0
  %987 = vmatprep.subr.mxu0 0.0
  %988 = vmatpush1.msra.mxu0 0.0
  %989 = vmatprep.subr.mxu0 0.0
  %990 = vmatpush1.msra.mxu0 0.0
  %991 = vmatprep.subr.mxu0 0.0
  %992 = vmatpush1.msra.mxu0 0.0
  %993 = vmatprep.subr.mxu0 0.0
  %994 = vmatpush1.msra.mxu0 0.0
  %995 = vmatprep.subr.mxu0 0.0
  %996 = vmatpush1.msra.mxu0 0.0
  %997 = vmatprep.subr.mxu0 0.0
  %998 = vmatpush1.msra.mxu0 0.0
  %999 = vmatprep.subr.mxu0 0.0
  %1000 = vmatpush1.msra.mxu0 0.0
  %1001 = vmatprep.subr.mxu0 0.0
  %1002 = vmatpush1.msra.mxu0 0.0
  %1003 = vmatprep.subr.mxu0 0.0
  %1004 = vmatpush1.msra.mxu0 0.0
  %1005 = vmatprep.subr.mxu0 0.0
  %1006 = vmatpush1.msra.mxu0 0.0
  %1007 = vmatprep.subr.mxu0 0.0
  %1008 = vmatpush1.msra.mxu0 0.0
  %1009 = vmatprep.subr.mxu0 0.0
  %1010 = vmatpush1.msra.mxu0 0.0
  %1011 = vmatprep.subr.mxu0 0.0
  %1012 = vmatpush1.msra.mxu0 0.0
  %1013 = vmatprep.subr.mxu0 0.0
  %1014 = vmatpush1.msra.mxu0 0.0
  %1015 = vmatprep.subr.mxu0 0.0
  %1016 = vmatpush1.msra.mxu0 %v984
  %1017 = vmatprep.subr.mxu0 0.0
  %1018 = vmatpush2.msra.mxu0 0.0
  %1019 = vmatprep.subr.mxu0 0.0
  %1020 = vmatpush2.msra.mxu0 0.0
  %1021 = vmatprep.subr.mxu0 0.0
  %1022 = vmatpush2.msra.mxu0 0.0
  %1023 = vmatprep.subr.mxu0 0.0
  %1024 = vmatpush2.msra.mxu0 0.0
  %1025 = vmatprep.subr.mxu0 0.0
  %1026 = vmatpush2.msra.mxu0 0.0
  %1027 = vmatprep.subr.mxu0 0.0
  %1028 = vmatpush2.msra.mxu0 0.0
  %1029 = vmatprep.subr.mxu0 0.0
  %1030 = vmatpush2.msra.mxu0 0.0
  %1031 = vmatprep.subr.mxu0 0.0
  %1032 = vmatpush2.msra.mxu0 0.0
  %1033 = vmatprep.subr.mxu0 0.0
  %1034 = vmatpush2.msra.mxu0 0.0
  %1035 = vmatprep.subr.mxu0 0.0
  %1036 = vmatpush2.msra.mxu0 0.0
  %1037 = vmatprep.subr.mxu0 0.0
  %1038 = vmatpush2.msra.mxu0 0.0
  %1039 = vmatprep.subr.mxu0 0.0
  %1040 = vmatpush2.msra.mxu0 0.0
  %1041 = vmatprep.subr.mxu0 0.0
  %1042 = vmatpush2.msra.mxu0 0.0
  %1043 = vmatprep.subr.mxu0 0.0
  %1044 = vmatpush2.msra.mxu0 0.0
  %1045 = vmatprep.subr.mxu0 0.0
  %1046 = vmatpush2.msra.mxu0 0.0
  %1047 = vmatprep.subr.mxu0 0.0
  %1048 = vmatpush2.msra.mxu0 0.0
  %1049 = vmatprep.mubr.f32.mxu0 0.0
  %1050 = vmatmul.mubr.f32.gmra.mxu0 %v72
  %v1051 = vpop.f32.mrf.mxu0
  %v1052 = vadd.f32 %v68, %v1051
  %v1053 = vpop.f32.mrf.mxu0
  %1054 = vdwg.mxu0
  %v1055 = vmax.f32 %v1052, 0.0
  %1056 = vmatprep.subr.mxu0 0.0
  %1057 = vmatpush1.msra.mxu0 0.0
  %1058 = vmatprep.subr.mxu0 0.0
  %1059 = vmatpush1.msra.mxu0 0.0
  %1060 = vmatprep.subr.mxu0 0.0
  %1061 = vmatpush1.msra.mxu0 0.0
  %1062 = vmatprep.subr.mxu0 0.0
  %1063 = vmatpush1.msra.mxu0 0.0
  %1064 = vmatprep.subr.mxu0 0.0
  %1065 = vmatpush1.msra.mxu0 0.0
  %1066 = vmatprep.subr.mxu0 0.0
  %1067 = vmatpush1.msra.mxu0 0.0
  %1068 = vmatprep.subr.mxu0 0.0
  %1069 = vmatpush1.msra.mxu0 0.0
  %1070 = vmatprep.subr.mxu0 0.0
  %1071 = vmatpush1.msra.mxu0 0.0
  %1072 = vmatprep.subr.mxu0 0.0
  %1073 = vmatpush1.msra.mxu0 0.0
  %1074 = vmatprep.subr.mxu0 0.0
  %1075 = vmatpush1.msra.mxu0 0.0
  %1076 = vmatprep.subr.mxu0 0.0
  %1077 = vmatpush1.msra.mxu0 0.0
  %1078 = vmatprep.subr.mxu0 0.0
  %1079 = vmatpush1.msra.mxu0 0.0
  %1080 = vmatprep.subr.mxu0 0.0
  %1081 = vmatpush1.msra.mxu0 0.0
  %1082 = vmatprep.subr.mxu0 0.0
  %1083 = vmatpush1.msra.mxu0 0.0
  %1084 = vmatprep.subr.mxu0 0.0
  %1085 = vmatpush1.msra.mxu0 0.0
  %1086 = vmatprep.subr.mxu0 0.0
  %1087 = vmatpush1.msra.mxu0 %v1055
  %1088 = vmatprep.subr.mxu0 0.0
  %1089 = vmatpush2.msra.mxu0 0.0
  %1090 = vmatprep.subr.mxu0 0.0
  %1091 = vmatpush2.msra.mxu0 0.0
  %1092 = vmatprep.subr.mxu0 0.0
  %1093 = vmatpush2.msra.mxu0 0.0
  %1094 = vmatprep.subr.mxu0 0.0
  %1095 = vmatpush2.msra.mxu0 0.0
  %1096 = vmatprep.subr.mxu0 0.0
  %1097 = vmatpush2.msra.mxu0 0.0
  %1098 = vmatprep.subr.mxu0 0.0
  %1099 = vmatpush2.msra.mxu0 0.0
  %1100 = vmatprep.subr.mxu0 0.0
  %1101 = vmatpush2.msra.mxu0 0.0
  %1102 = vmatprep.subr.mxu0 0.0
  %1103 = vmatpush2.msra.mxu0 0.0
  %1104 = vmatprep.subr.mxu0 0.0
  %1105 = vmatpush2.msra.mxu0 0.0
  %1106 = vmatprep.subr.mxu0 0.0
  %1107 = vmatpush2.msra.mxu0 0.0
  %1108 = vmatprep.subr.mxu0 0.0
  %1109 = vmatpush2.msra.mxu0 0.0
  %1110 = vmatprep.subr.mxu0 0.0
  %1111 = vmatpush2.msra.mxu0 0.0
  %1112 = vmatprep.subr.mxu0 0.0
  %1113 = vmatpush2.msra.mxu0 0.0
  %1114 = vmatprep.subr.mxu0 0.0
  %1115 = vmatpush2.msra.mxu0 0.0
  %1116 = vmatprep.subr.mxu0 0.0
  %1117 = vmatpush2.msra.mxu0 0.0
  %1118 = vmatprep.subr.mxu0 0.0
  %1119 = vmatpush2.msra.mxu0 0.0
  %1120 = vmatprep.mubr.f32.mxu0 0.0
  %1121 = vmatmul.mubr.f32.gmra.mxu0 %v151
  %v1122 = vpop.f32.mrf.mxu0
  %v1123 = vadd.f32 %v148, %v1122
  %v1124 = vpop.f32.mrf.mxu0
  %1125 = vdwg.mxu0
  %v1126 = vxor.u32 %v1123, 2147483648
  %v1127 = vmul.f32 %v1126, 1.442695
  %v1128 = vpow.pop %v1127
  %v1129 = vadd.f32 %v1128, 1.0
  %v1130 = vrcp.pop %v1129
  %v1131 = vmul.f32 1.0, %v1130
  %v1132 = vlaneseq
  %v1133 = vshrl.u32 %v1132, 7
  %v1134 = vsub.s32 0, %v1133
  %v1135 = vrot.slane %v967, %v1134
  %v1136 = vmul.f32 %v1131, %v1135
  %1137 = vadd.xlane.f32.xlu0 %v1136
  %v1138 = vpop.xlane.xlu0 %1137
  %v1139 = vadd.f32 %v1138, 0.0
  %v1141 = vlaneseq
  %v1142 = vshrl.u32 %v1141, 7
  %v1143 = vsub.s32 %v239, %v1142
  %v1144 = vrot.slane %v1139, %v1143
  %1146 = vst.msk [vmem:[%s8 + $0x5] sm:$0x1] %vm245, %v1144
  %v1147 = vld [vmem:[%s1 + $0x6] sm:$0x1]
  %s1148 = sadd.s32 0, 12
  %s1149 = scalar_lea.vmem %s0, %s1148
  %v1150 = vld [vmem:[%s1149] sm:$0x1]
  %v1151 = vlaneseq
  %v1152 = vshrl.u32 %v1151, 7
  %v1153 = vsub.s32 0, %v1152
  %v1154 = vrot.slane %v1150, %v1153
  %v1155 = vmul.f32 %v40, %v1154
  %v1156 = vadd.f32 %v50, %v1155
  %v1157 = vld [vmem:[%s1149 + $0x1] sm:$0x1]
  %v1158 = vlaneseq
  %v1159 = vshrl.u32 %v1158, 7
  %v1160 = vsub.s32 0, %v1159
  %v1161 = vrot.slane %v1157, %v1160
  %v1162 = vmul.f32 %v56, %v1161
  %v1163 = vadd.f32 %v1156, %v1162
  %v1164 = vmax.f32 %v1163, 0.0
  %1165 = vmatprep.subr.mxu0 0.0
  %1166 = vmatpush1.msra.mxu0 0.0
  %1167 = vmatprep.subr.mxu0 0.0
  %1168 = vmatpush1.msra.mxu0 0.0
  %1169 = vmatprep.subr.mxu0 0.0
  %1170 = vmatpush1.msra.mxu0 0.0
  %1171 = vmatprep.subr.mxu0 0.0
  %1172 = vmatpush1.msra.mxu0 0.0
  %1173 = vmatprep.subr.mxu0 0.0
  %1174 = vmatpush1.msra.mxu0 0.0
  %1175 = vmatprep.subr.mxu0 0.0
  %1176 = vmatpush1.msra.mxu0 0.0
  %1177 = vmatprep.subr.mxu0 0.0
  %1178 = vmatpush1.msra.mxu0 0.0
  %1179 = vmatprep.subr.mxu0 0.0
  %1180 = vmatpush1.msra.mxu0 0.0
  %1181 = vmatprep.subr.mxu0 0.0
  %1182 = vmatpush1.msra.mxu0 0.0
  %1183 = vmatprep.subr.mxu0 0.0
  %1184 = vmatpush1.msra.mxu0 0.0
  %1185 = vmatprep.subr.mxu0 0.0
  %1186 = vmatpush1.msra.mxu0 0.0
  %1187 = vmatprep.subr.mxu0 0.0
  %1188 = vmatpush1.msra.mxu0 0.0
  %1189 = vmatprep.subr.mxu0 0.0
  %1190 = vmatpush1.msra.mxu0 0.0
  %1191 = vmatprep.subr.mxu0 0.0
  %1192 = vmatpush1.msra.mxu0 0.0
  %1193 = vmatprep.subr.mxu0 0.0
  %1194 = vmatpush1.msra.mxu0 0.0
  %1195 = vmatprep.subr.mxu0 0.0
  %1196 = vmatpush1.msra.mxu0 %v1164
  %1197 = vmatprep.subr.mxu0 0.0
  %1198 = vmatpush2.msra.mxu0 0.0
  %1199 = vmatprep.subr.mxu0 0.0
  %1200 = vmatpush2.msra.mxu0 0.0
  %1201 = vmatprep.subr.mxu0 0.0
  %1202 = vmatpush2.msra.mxu0 0.0
  %1203 = vmatprep.subr.mxu0 0.0
  %1204 = vmatpush2.msra.mxu0 0.0
  %1205 = vmatprep.subr.mxu0 0.0
  %1206 = vmatpush2.msra.mxu0 0.0
  %1207 = vmatprep.subr.mxu0 0.0
  %1208 = vmatpush2.msra.mxu0 0.0
  %1209 = vmatprep.subr.mxu0 0.0
  %1210 = vmatpush2.msra.mxu0 0.0
  %1211 = vmatprep.subr.mxu0 0.0
  %1212 = vmatpush2.msra.mxu0 0.0
  %1213 = vmatprep.subr.mxu0 0.0
  %1214 = vmatpush2.msra.mxu0 0.0
  %1215 = vmatprep.subr.mxu0 0.0
  %1216 = vmatpush2.msra.mxu0 0.0
  %1217 = vmatprep.subr.mxu0 0.0
  %1218 = vmatpush2.msra.mxu0 0.0
  %1219 = vmatprep.subr.mxu0 0.0
  %1220 = vmatpush2.msra.mxu0 0.0
  %1221 = vmatprep.subr.mxu0 0.0
  %1222 = vmatpush2.msra.mxu0 0.0
  %1223 = vmatprep.subr.mxu0 0.0
  %1224 = vmatpush2.msra.mxu0 0.0
  %1225 = vmatprep.subr.mxu0 0.0
  %1226 = vmatpush2.msra.mxu0 0.0
  %1227 = vmatprep.subr.mxu0 0.0
  %1228 = vmatpush2.msra.mxu0 0.0
  %1229 = vmatprep.mubr.f32.mxu0 0.0
  %1230 = vmatmul.mubr.f32.gmra.mxu0 %v72
  %v1231 = vpop.f32.mrf.mxu0
  %v1232 = vadd.f32 %v68, %v1231
  %v1233 = vpop.f32.mrf.mxu0
  %1234 = vdwg.mxu0
  %v1235 = vmax.f32 %v1232, 0.0
  %1236 = vmatprep.subr.mxu0 0.0
  %1237 = vmatpush1.msra.mxu0 0.0
  %1238 = vmatprep.subr.mxu0 0.0
  %1239 = vmatpush1.msra.mxu0 0.0
  %1240 = vmatprep.subr.mxu0 0.0
  %1241 = vmatpush1.msra.mxu0 0.0
  %1242 = vmatprep.subr.mxu0 0.0
  %1243 = vmatpush1.msra.mxu0 0.0
  %1244 = vmatprep.subr.mxu0 0.0
  %1245 = vmatpush1.msra.mxu0 0.0
  %1246 = vmatprep.subr.mxu0 0.0
  %1247 = vmatpush1.msra.mxu0 0.0
  %1248 = vmatprep.subr.mxu0 0.0
  %1249 = vmatpush1.msra.mxu0 0.0
  %1250 = vmatprep.subr.mxu0 0.0
  %1251 = vmatpush1.msra.mxu0 0.0
  %1252 = vmatprep.subr.mxu0 0.0
  %1253 = vmatpush1.msra.mxu0 0.0
  %1254 = vmatprep.subr.mxu0 0.0
  %1255 = vmatpush1.msra.mxu0 0.0
  %1256 = vmatprep.subr.mxu0 0.0
  %1257 = vmatpush1.msra.mxu0 0.0
  %1258 = vmatprep.subr.mxu0 0.0
  %1259 = vmatpush1.msra.mxu0 0.0
  %1260 = vmatprep.subr.mxu0 0.0
  %1261 = vmatpush1.msra.mxu0 0.0
  %1262 = vmatprep.subr.mxu0 0.0
  %1263 = vmatpush1.msra.mxu0 0.0
  %1264 = vmatprep.subr.mxu0 0.0
  %1265 = vmatpush1.msra.mxu0 0.0
  %1266 = vmatprep.subr.mxu0 0.0
  %1267 = vmatpush1.msra.mxu0 %v1235
  %1268 = vmatprep.subr.mxu0 0.0
  %1269 = vmatpush2.msra.mxu0 0.0
  %1270 = vmatprep.subr.mxu0 0.0
  %1271 = vmatpush2.msra.mxu0 0.0
  %1272 = vmatprep.subr.mxu0 0.0
  %1273 = vmatpush2.msra.mxu0 0.0
  %1274 = vmatprep.subr.mxu0 0.0
  %1275 = vmatpush2.msra.mxu0 0.0
  %1276 = vmatprep.subr.mxu0 0.0
  %1277 = vmatpush2.msra.mxu0 0.0
  %1278 = vmatprep.subr.mxu0 0.0
  %1279 = vmatpush2.msra.mxu0 0.0
  %1280 = vmatprep.subr.mxu0 0.0
  %1281 = vmatpush2.msra.mxu0 0.0
  %1282 = vmatprep.subr.mxu0 0.0
  %1283 = vmatpush2.msra.mxu0 0.0
  %1284 = vmatprep.subr.mxu0 0.0
  %1285 = vmatpush2.msra.mxu0 0.0
  %1286 = vmatprep.subr.mxu0 0.0
  %1287 = vmatpush2.msra.mxu0 0.0
  %1288 = vmatprep.subr.mxu0 0.0
  %1289 = vmatpush2.msra.mxu0 0.0
  %1290 = vmatprep.subr.mxu0 0.0
  %1291 = vmatpush2.msra.mxu0 0.0
  %1292 = vmatprep.subr.mxu0 0.0
  %1293 = vmatpush2.msra.mxu0 0.0
  %1294 = vmatprep.subr.mxu0 0.0
  %1295 = vmatpush2.msra.mxu0 0.0
  %1296 = vmatprep.subr.mxu0 0.0
  %1297 = vmatpush2.msra.mxu0 0.0
  %1298 = vmatprep.subr.mxu0 0.0
  %1299 = vmatpush2.msra.mxu0 0.0
  %1300 = vmatprep.mubr.f32.mxu0 0.0
  %1301 = vmatmul.mubr.f32.gmra.mxu0 %v151
  %v1302 = vpop.f32.mrf.mxu0
  %v1303 = vadd.f32 %v148, %v1302
  %v1304 = vpop.f32.mrf.mxu0
  %1305 = vdwg.mxu0
  %v1306 = vxor.u32 %v1303, 2147483648
  %v1307 = vmul.f32 %v1306, 1.442695
  %v1308 = vpow.pop %v1307
  %v1309 = vadd.f32 %v1308, 1.0
  %v1310 = vrcp.pop %v1309
  %v1311 = vmul.f32 1.0, %v1310
  %v1312 = vlaneseq
  %v1313 = vshrl.u32 %v1312, 7
  %v1314 = vsub.s32 0, %v1313
  %v1315 = vrot.slane %v1147, %v1314
  %v1316 = vmul.f32 %v1311, %v1315
  %1317 = vadd.xlane.f32.xlu0 %v1316
  %v1318 = vpop.xlane.xlu0 %1317
  %v1319 = vadd.f32 %v1318, 0.0
  %v1321 = vlaneseq
  %v1322 = vshrl.u32 %v1321, 7
  %v1323 = vsub.s32 %v239, %v1322
  %v1324 = vrot.slane %v1319, %v1323
  %1326 = vst.msk [vmem:[%s8 + $0x6] sm:$0x1] %vm245, %v1324
  %v1327 = vld [vmem:[%s1 + $0x7] sm:$0x1]
  %s1328 = sadd.s32 0, 14
  %s1329 = scalar_lea.vmem %s0, %s1328
  %v1330 = vld [vmem:[%s1329] sm:$0x1]
  %v1331 = vlaneseq
  %v1332 = vshrl.u32 %v1331, 7
  %v1333 = vsub.s32 0, %v1332
  %v1334 = vrot.slane %v1330, %v1333
  %v1335 = vmul.f32 %v40, %v1334
  %v1336 = vadd.f32 %v50, %v1335
  %v1337 = vld [vmem:[%s1329 + $0x1] sm:$0x1]
  %v1338 = vlaneseq
  %v1339 = vshrl.u32 %v1338, 7
  %v1340 = vsub.s32 0, %v1339
  %v1341 = vrot.slane %v1337, %v1340
  %v1342 = vmul.f32 %v56, %v1341
  %v1343 = vadd.f32 %v1336, %v1342
  %v1344 = vmax.f32 %v1343, 0.0
  %1345 = vmatprep.subr.mxu0 0.0
  %1346 = vmatpush1.msra.mxu0 0.0
  %1347 = vmatprep.subr.mxu0 0.0
  %1348 = vmatpush1.msra.mxu0 0.0
  %1349 = vmatprep.subr.mxu0 0.0
  %1350 = vmatpush1.msra.mxu0 0.0
  %1351 = vmatprep.subr.mxu0 0.0
  %1352 = vmatpush1.msra.mxu0 0.0
  %1353 = vmatprep.subr.mxu0 0.0
  %1354 = vmatpush1.msra.mxu0 0.0
  %1355 = vmatprep.subr.mxu0 0.0
  %1356 = vmatpush1.msra.mxu0 0.0
  %1357 = vmatprep.subr.mxu0 0.0
  %1358 = vmatpush1.msra.mxu0 0.0
  %1359 = vmatprep.subr.mxu0 0.0
  %1360 = vmatpush1.msra.mxu0 0.0
  %1361 = vmatprep.subr.mxu0 0.0
  %1362 = vmatpush1.msra.mxu0 0.0
  %1363 = vmatprep.subr.mxu0 0.0
  %1364 = vmatpush1.msra.mxu0 0.0
  %1365 = vmatprep.subr.mxu0 0.0
  %1366 = vmatpush1.msra.mxu0 0.0
  %1367 = vmatprep.subr.mxu0 0.0
  %1368 = vmatpush1.msra.mxu0 0.0
  %1369 = vmatprep.subr.mxu0 0.0
  %1370 = vmatpush1.msra.mxu0 0.0
  %1371 = vmatprep.subr.mxu0 0.0
  %1372 = vmatpush1.msra.mxu0 0.0
  %1373 = vmatprep.subr.mxu0 0.0
  %1374 = vmatpush1.msra.mxu0 0.0
  %1375 = vmatprep.subr.mxu0 0.0
  %1376 = vmatpush1.msra.mxu0 %v1344
  %1377 = vmatprep.subr.mxu0 0.0
  %1378 = vmatpush2.msra.mxu0 0.0
  %1379 = vmatprep.subr.mxu0 0.0
  %1380 = vmatpush2.msra.mxu0 0.0
  %1381 = vmatprep.subr.mxu0 0.0
  %1382 = vmatpush2.msra.mxu0 0.0
  %1383 = vmatprep.subr.mxu0 0.0
  %1384 = vmatpush2.msra.mxu0 0.0
  %1385 = vmatprep.subr.mxu0 0.0
  %1386 = vmatpush2.msra.mxu0 0.0
  %1387 = vmatprep.subr.mxu0 0.0
  %1388 = vmatpush2.msra.mxu0 0.0
  %1389 = vmatprep.subr.mxu0 0.0
  %1390 = vmatpush2.msra.mxu0 0.0
  %1391 = vmatprep.subr.mxu0 0.0
  %1392 = vmatpush2.msra.mxu0 0.0
  %1393 = vmatprep.subr.mxu0 0.0
  %1394 = vmatpush2.msra.mxu0 0.0
  %1395 = vmatprep.subr.mxu0 0.0
  %1396 = vmatpush2.msra.mxu0 0.0
  %1397 = vmatprep.subr.mxu0 0.0
  %1398 = vmatpush2.msra.mxu0 0.0
  %1399 = vmatprep.subr.mxu0 0.0
  %1400 = vmatpush2.msra.mxu0 0.0
  %1401 = vmatprep.subr.mxu0 0.0
  %1402 = vmatpush2.msra.mxu0 0.0
  %1403 = vmatprep.subr.mxu0 0.0
  %1404 = vmatpush2.msra.mxu0 0.0
  %1405 = vmatprep.subr.mxu0 0.0
  %1406 = vmatpush2.msra.mxu0 0.0
  %1407 = vmatprep.subr.mxu0 0.0
  %1408 = vmatpush2.msra.mxu0 0.0
  %1409 = vmatprep.mubr.f32.mxu0 0.0
  %1410 = vmatmul.mubr.f32.gmra.mxu0 %v72
  %v1411 = vpop.f32.mrf.mxu0
  %v1412 = vadd.f32 %v68, %v1411
  %v1413 = vpop.f32.mrf.mxu0
  %1414 = vdwg.mxu0
  %v1415 = vmax.f32 %v1412, 0.0
  %1416 = vmatprep.subr.mxu0 0.0
  %1417 = vmatpush1.msra.mxu0 0.0
  %1418 = vmatprep.subr.mxu0 0.0
  %1419 = vmatpush1.msra.mxu0 0.0
  %1420 = vmatprep.subr.mxu0 0.0
  %1421 = vmatpush1.msra.mxu0 0.0
  %1422 = vmatprep.subr.mxu0 0.0
  %1423 = vmatpush1.msra.mxu0 0.0
  %1424 = vmatprep.subr.mxu0 0.0
  %1425 = vmatpush1.msra.mxu0 0.0
  %1426 = vmatprep.subr.mxu0 0.0
  %1427 = vmatpush1.msra.mxu0 0.0
  %1428 = vmatprep.subr.mxu0 0.0
  %1429 = vmatpush1.msra.mxu0 0.0
  %1430 = vmatprep.subr.mxu0 0.0
  %1431 = vmatpush1.msra.mxu0 0.0
  %1432 = vmatprep.subr.mxu0 0.0
  %1433 = vmatpush1.msra.mxu0 0.0
  %1434 = vmatprep.subr.mxu0 0.0
  %1435 = vmatpush1.msra.mxu0 0.0
  %1436 = vmatprep.subr.mxu0 0.0
  %1437 = vmatpush1.msra.mxu0 0.0
  %1438 = vmatprep.subr.mxu0 0.0
  %1439 = vmatpush1.msra.mxu0 0.0
  %1440 = vmatprep.subr.mxu0 0.0
  %1441 = vmatpush1.msra.mxu0 0.0
  %1442 = vmatprep.subr.mxu0 0.0
  %1443 = vmatpush1.msra.mxu0 0.0
  %1444 = vmatprep.subr.mxu0 0.0
  %1445 = vmatpush1.msra.mxu0 0.0
  %1446 = vmatprep.subr.mxu0 0.0
  %1447 = vmatpush1.msra.mxu0 %v1415
  %1448 = vmatprep.subr.mxu0 0.0
  %1449 = vmatpush2.msra.mxu0 0.0
  %1450 = vmatprep.subr.mxu0 0.0
  %1451 = vmatpush2.msra.mxu0 0.0
  %1452 = vmatprep.subr.mxu0 0.0
  %1453 = vmatpush2.msra.mxu0 0.0
  %1454 = vmatprep.subr.mxu0 0.0
  %1455 = vmatpush2.msra.mxu0 0.0
  %1456 = vmatprep.subr.mxu0 0.0
  %1457 = vmatpush2.msra.mxu0 0.0
  %1458 = vmatprep.subr.mxu0 0.0
  %1459 = vmatpush2.msra.mxu0 0.0
  %1460 = vmatprep.subr.mxu0 0.0
  %1461 = vmatpush2.msra.mxu0 0.0
  %1462 = vmatprep.subr.mxu0 0.0
  %1463 = vmatpush2.msra.mxu0 0.0
  %1464 = vmatprep.subr.mxu0 0.0
  %1465 = vmatpush2.msra.mxu0 0.0
  %1466 = vmatprep.subr.mxu0 0.0
  %1467 = vmatpush2.msra.mxu0 0.0
  %1468 = vmatprep.subr.mxu0 0.0
  %1469 = vmatpush2.msra.mxu0 0.0
  %1470 = vmatprep.subr.mxu0 0.0
  %1471 = vmatpush2.msra.mxu0 0.0
  %1472 = vmatprep.subr.mxu0 0.0
  %1473 = vmatpush2.msra.mxu0 0.0
  %1474 = vmatprep.subr.mxu0 0.0
  %1475 = vmatpush2.msra.mxu0 0.0
  %1476 = vmatprep.subr.mxu0 0.0
  %1477 = vmatpush2.msra.mxu0 0.0
  %1478 = vmatprep.subr.mxu0 0.0
  %1479 = vmatpush2.msra.mxu0 0.0
  %1480 = vmatprep.mubr.f32.mxu0 0.0
  %1481 = vmatmul.mubr.f32.gmra.mxu0 %v151
  %v1482 = vpop.f32.mrf.mxu0
  %v1483 = vadd.f32 %v148, %v1482
  %v1484 = vpop.f32.mrf.mxu0
  %1485 = vdwg.mxu0
  %v1486 = vxor.u32 %v1483, 2147483648
  %v1487 = vmul.f32 %v1486, 1.442695
  %v1488 = vpow.pop %v1487
  %v1489 = vadd.f32 %v1488, 1.0
  %v1490 = vrcp.pop %v1489
  %v1491 = vmul.f32 1.0, %v1490
  %v1492 = vlaneseq
  %v1493 = vshrl.u32 %v1492, 7
  %v1494 = vsub.s32 0, %v1493
  %v1495 = vrot.slane %v1327, %v1494
  %v1496 = vmul.f32 %v1491, %v1495
  %1497 = vadd.xlane.f32.xlu0 %v1496
  %v1498 = vpop.xlane.xlu0 %1497
  %v1499 = vadd.f32 %v1498, 0.0
  %v1501 = vlaneseq
  %v1502 = vshrl.u32 %v1501, 7
  %v1503 = vsub.s32 %v239, %v1502
  %v1504 = vrot.slane %v1499, %v1503
  %1506 = vst.msk [vmem:[%s8 + $0x7] sm:$0x1] %vm245, %v1504
  // Predicated region
  $region34: #{tpu_custom_call.1} parent=0 // pred_check
    _
  $region35: #{tpu_custom_call.1} parent=0 // pred_check_branch
    %1508 = sbr.rel (0) target = $region37
  $region36: #{tpu_custom_call.1} parent=0 // pred_region
    _
  $region37: #{tpu_custom_call.1} parent=0 // pred_fallthru
    _
  // Predicated region
  $region38: #{tpu_custom_call.1} parent=0 // pred_check
    _
  $region39: #{tpu_custom_call.1} parent=0 // pred_check_branch
    %1510 = sbr.rel (0) target = $region41
  $region40: #{tpu_custom_call.1} parent=0 // pred_region
    _
  $region41: #{tpu_custom_call.1} parent=0 // pred_fallthru
    _

</llo_original>
